<compile_context>
chip_gen: v7x
topology: tpu7x:2x2x1
jax: 0.10.0
libtpu: 0.0.40
codegen_flags: <defaults>
</compile_context>

<pallas_src>
import math
import jax
import jax.numpy as jnp
from jax import lax
from jax.experimental import pallas as pl
from jax.experimental.pallas import tpu as pltpu

# ---- small synthetic BERT config ----
B, S, H = 2, 8, 32
NUM_HEADS, HEAD_DIM = 2, 16
INTERMEDIATE = 64
NUM_LAYERS = 2
VOCAB = 100
MAX_POS = 16
NUM_LABELS = 2
LN_EPS = 1e-12
M = B * S            # flattened (batch*seq) matmul M dimension
QKV = 3 * H
LOG2_S = S.bit_length() - 1
assert (1 << LOG2_S) == S, "S must be a power of two for the shift-based block mask"


# ---------------- kernel helpers (traced inside the kernel, f32 math) ----------------
def _layer_norm(x, gamma, beta):
    mu = jnp.mean(x, axis=-1, keepdims=True)
    var = jnp.mean((x - mu) ** 2, axis=-1, keepdims=True)
    return (x - mu) * lax.rsqrt(var + LN_EPS) * gamma + beta


def _gelu(x):
    # TODO(synk): HF BERT default is exact erf GELU; tanh approximation kept for robust
    # Mosaic lowering (erf_p support is not guaranteed), causing tiny numeric drift.
    return 0.5 * x * (1.0 + jnp.tanh(0.7978845608028654 * (x + 0.044715 * x * x * x)))


def _bf16(x):
    return x.astype(jnp.bfloat16)


# ---------------- single fused Pallas kernel ----------------
def fused_bert_kernel(text_ref, wemb_ref, pemb_ref, temb_ref, eg_ref, eb_ref,
                      wqkv_ref, bqkv_ref, wo_ref, bo_ref, g1_ref, b1_ref,
                      wi_ref, bi_ref, wo2_ref, bo2_ref, g2_ref, b2_ref,
                      wp_ref, bp_ref, wc_ref, bc_ref, labels_ref,
                      logits_ref, loss_ref):
    # ---- in-kernel embedding lookup: one-hot(text) @ word_emb (single MXU push) ----
    vocab_iota = lax.broadcasted_iota(jnp.int32, (M, VOCAB), 1)
    onehot_tok = (vocab_iota == text_ref[...]).astype(jnp.float32)        # [M, VOCAB]
    word = jnp.dot(onehot_tok, wemb_ref[...],
                   preferred_element_type=jnp.float32)                    # [M, H]
    pos = pemb_ref[0:S, :]                                                # [S, H]
    pos_tiled = jnp.concatenate([pos] * B, axis=0)                        # [M, H]
    # TODO(synk): token_type_ids fixed to 0 and no attention/padding mask (all S tokens
    # valid), matching the module's default call signature.
    emb = word + pos_tiled + temb_ref[0:1, :]
    x = _layer_norm(emb, eg_ref[...], eb_ref[...])                        # [M, H], f32

    # ---- layer-invariant block-diagonal attention mask (hoisted out of layer loop) ----
    r_iota = lax.broadcasted_iota(jnp.int32, (M, M), 0)
    c_iota = lax.broadcasted_iota(jnp.int32, (M, M), 1)
    same_seq = (r_iota >> LOG2_S) == (c_iota >> LOG2_S)
    attn_mask = jnp.where(same_seq, jnp.float32(0.0), jnp.float32(-1e30)) # [M, M]

    # ---- transformer encoder layers (statically unrolled, weights stacked on L) ----
    # Note: 1/sqrt(HEAD_DIM) is already folded into the Q third of wqkv at init.
    for l in range(NUM_LAYERS):
        # fused QKV projection: one [M, H] @ [H, 3H] bf16 matmul, f32 accumulation
        qkv = jnp.dot(_bf16(x), wqkv_ref[l],
                      preferred_element_type=jnp.float32) + bqkv_ref[l]   # [M, 3H]

        # per-head block-diagonal attention over all M rows at once
        ctx_heads = []
        for h in range(NUM_HEADS):
            c0 = h * HEAD_DIM
            qh = _bf16(qkv[:, c0:c0 + HEAD_DIM])                          # [M, d]
            kh = _bf16(qkv[:, H + c0:H + c0 + HEAD_DIM])
            vh = _bf16(qkv[:, 2 * H + c0:2 * H + c0 + HEAD_DIM])
            s = lax.dot_general(qh, kh, (((1,), (1,)), ((), ())),
                                preferred_element_type=jnp.float32)       # [M, M]
            s = s + attn_mask
            s = s - jnp.max(s, axis=-1, keepdims=True)
            p = jnp.exp(s)
            p = p / jnp.sum(p, axis=-1, keepdims=True)                    # exact softmax
            ctx_heads.append(jnp.dot(_bf16(p), vh,
                                     preferred_element_type=jnp.float32)) # [M, d]
        ctx = jnp.concatenate(ctx_heads, axis=-1)                         # [M, H]

        attn = jnp.dot(_bf16(ctx), wo_ref[l],
                       preferred_element_type=jnp.float32) + bo_ref[l]
        # residual + LayerNorm (dropout omitted: eval semantics)
        h1 = _layer_norm(x + attn, g1_ref[l], b1_ref[l])

        # feed-forward
        ff = _gelu(jnp.dot(_bf16(h1), wi_ref[l],
                           preferred_element_type=jnp.float32) + bi_ref[l])
        ff = jnp.dot(_bf16(ff), wo2_ref[l],
                     preferred_element_type=jnp.float32) + bo2_ref[l]
        x = _layer_norm(h1 + ff, g2_ref[l], b2_ref[l])

    # ---- pooler ([CLS] token of every example) + classifier ----
    cls = jnp.concatenate([x[b * S:b * S + 1, :] for b in range(B)], axis=0)   # [B, H]
    pooled = jnp.tanh(jnp.dot(_bf16(cls), wp_ref[...],
                              preferred_element_type=jnp.float32) + bp_ref[...])
    logits = jnp.dot(_bf16(pooled), wc_ref[...],
                     preferred_element_type=jnp.float32) + bc_ref[...]
    logits_ref[...] = logits

    # ---- cross-entropy (mean over batch), labels read as SMEM scalars ----
    mx = jnp.max(logits, axis=-1, keepdims=True)
    lse = mx + jnp.log(jnp.sum(jnp.exp(logits - mx), axis=-1, keepdims=True))
    logp = logits - lse                                                   # [B, NUM_LABELS]
    col = lax.broadcasted_iota(jnp.int32, (B, NUM_LABELS), 1)
    row = lax.broadcasted_iota(jnp.int32, (B, NUM_LABELS), 0)
    lab = jnp.zeros((B, NUM_LABELS), jnp.int32)
    for b in range(B):
        lab = jnp.where(row == b, labels_ref[b], lab)
    onehot = (col == lab).astype(jnp.float32)
    per_ex = -jnp.sum(onehot * logp, axis=-1, keepdims=True)              # [B, 1]
    loss_ref[...] = jnp.sum(per_ex, axis=0, keepdims=True) * (1.0 / B)


# ---------------- pallas_call wrapper ----------------
def _vmem_spec():
    return pl.BlockSpec(memory_space=pltpu.MemorySpace.VMEM)


def _smem_spec():
    return pl.BlockSpec(memory_space=pltpu.MemorySpace.SMEM)


@jax.jit
def bert_forward(text, labels, params):
    # only layout plumbing stays outside the kernel: flatten token ids to [M, 1]
    text2d = text.reshape(M, 1).astype(jnp.int32)
    labels1d = labels.reshape(B).astype(jnp.int32)

    logits, loss = pl.pallas_call(
        fused_bert_kernel,
        out_shape=(jax.ShapeDtypeStruct((B, NUM_LABELS), jnp.float32),
                   jax.ShapeDtypeStruct((1, 1), jnp.float32)),
        in_specs=[_vmem_spec()] * 22 + [_smem_spec()],
        out_specs=(_vmem_spec(), _vmem_spec()),
    )(text2d, params['word_emb'], params['pos_emb'], params['tok_emb'],
      params['emb_ln_g'], params['emb_ln_b'],
      params['wqkv'], params['bqkv'], params['wo'], params['bo'],
      params['ln1_g'], params['ln1_b'],
      params['wi'], params['bi'], params['wo2'], params['bo2'],
      params['ln2_g'], params['ln2_b'],
      params['wp'], params['bp'], params['wc'], params['bc'],
      labels1d)
    return loss[0, 0], logits


# ---------------- deterministic parameter init ----------------
def init_params(key):
    std = 0.02
    keys = iter(jax.random.split(key, 64))

    def w(shape):
        return std * jax.random.normal(next(keys), shape, dtype=jnp.float32)

    zeros = lambda shape: jnp.zeros(shape, jnp.float32)
    ones = lambda shape: jnp.ones(shape, jnp.float32)
    bf = lambda x: x.astype(jnp.bfloat16)          # MXU-native weight dtype
    scale = 1.0 / math.sqrt(HEAD_DIM)              # folded into Q projection (exact)

    wqkv, wo, wi, wo2 = [], [], [], []
    for _ in range(NUM_LAYERS):
        wq = w((H, H)) * scale                     # attention score scale folded here
        wqkv.append(jnp.concatenate([wq, w((H, H)), w((H, H))], axis=1))
        wo.append(w((H, H)))
        wi.append(w((H, INTERMEDIATE)))
        wo2.append(w((INTERMEDIATE, H)))

    return {
        'word_emb': w((VOCAB, H)),                 # f32: keeps one-hot gather exact
        'pos_emb': w((MAX_POS, H)),
        'tok_emb': w((2, H)),
        'emb_ln_g': ones((1, H)),
        'emb_ln_b': zeros((1, H)),
        'wqkv': bf(jnp.stack(wqkv)),               # [L, H, 3H] bf16
        'bqkv': zeros((NUM_LAYERS, 1, QKV)),       # zero; Q-part would also carry scale
        'wo': bf(jnp.stack(wo)),                   # [L, H, H] bf16
        'bo': zeros((NUM_LAYERS, 1, H)),
        'ln1_g': ones((NUM_LAYERS, 1, H)),
        'ln1_b': zeros((NUM_LAYERS, 1, H)),
        'wi': bf(jnp.stack(wi)),                   # [L, H, I] bf16
        'bi': zeros((NUM_LAYERS, 1, INTERMEDIATE)),
        'wo2': bf(jnp.stack(wo2)),                 # [L, I, H] bf16
        'bo2': zeros((NUM_LAYERS, 1, H)),
        'ln2_g': ones((NUM_LAYERS, 1, H)),
        'ln2_b': zeros((NUM_LAYERS, 1, H)),
        'wp': bf(w((H, H))),
        'bp': zeros((1, H)),
        'wc': bf(w((H, NUM_LABELS))),
        'bc': zeros((1, NUM_LABELS)),
    }


if __name__ == "__main__":
    key = jax.random.PRNGKey(0)
    pkey, tkey, lkey = jax.random.split(key, 3)
    params = init_params(pkey)
    text = jax.random.randint(tkey, (B, S), 0, VOCAB, dtype=jnp.int32)
    labels = jax.random.randint(lkey, (B,), 0, NUM_LABELS, dtype=jnp.int32)

    loss, logits = bert_forward(text, labels, params)
    jax.block_until_ready((loss, logits))
    assert logits.shape == (B, NUM_LABELS) and loss.shape == ()
    print("KERNEL_OK")
</pallas_src>

<mosaic_0001>
module attributes {stable_mosaic.version = 11 : i64} {
  func.func @fused_bert_kernel(%arg0: memref<16x1xi32, #tpu.memory_space<vmem>>, %arg1: memref<100x32xf32, #tpu.memory_space<vmem>>, %arg2: memref<16x32xf32, #tpu.memory_space<vmem>>, %arg3: memref<2x32xf32, #tpu.memory_space<vmem>>, %arg4: memref<1x32xf32, #tpu.memory_space<vmem>>, %arg5: memref<1x32xf32, #tpu.memory_space<vmem>>, %arg6: memref<2x32x96xbf16, #tpu.memory_space<vmem>>, %arg7: memref<2x1x96xf32, #tpu.memory_space<vmem>>, %arg8: memref<2x32x32xbf16, #tpu.memory_space<vmem>>, %arg9: memref<2x1x32xf32, #tpu.memory_space<vmem>>, %arg10: memref<2x1x32xf32, #tpu.memory_space<vmem>>, %arg11: memref<2x1x32xf32, #tpu.memory_space<vmem>>, %arg12: memref<2x32x64xbf16, #tpu.memory_space<vmem>>, %arg13: memref<2x1x64xf32, #tpu.memory_space<vmem>>, %arg14: memref<2x64x32xbf16, #tpu.memory_space<vmem>>, %arg15: memref<2x1x32xf32, #tpu.memory_space<vmem>>, %arg16: memref<2x1x32xf32, #tpu.memory_space<vmem>>, %arg17: memref<2x1x32xf32, #tpu.memory_space<vmem>>, %arg18: memref<32x32xbf16, #tpu.memory_space<vmem>>, %arg19: memref<1x32xf32, #tpu.memory_space<vmem>>, %arg20: memref<32x2xbf16, #tpu.memory_space<vmem>>, %arg21: memref<1x2xf32, #tpu.memory_space<vmem>>, %arg22: memref<2xi32, #tpu.memory_space<smem>>, %arg23: memref<2x2xf32, #tpu.memory_space<vmem>>, %arg24: memref<1x1xf32, #tpu.memory_space<vmem>>) attributes {dimension_semantics = [], scalar_prefetch = 0 : i64, scratch_operands = 0 : i64, tpu.core_type = #tpu.core_type<tc>} {
    %0 = tpu.iota {dimensions = array<i32: 1>} : vector<16x100xi32>
    %c0 = arith.constant 0 : index
    %c0_0 = arith.constant 0 : index
    %1 = vector.load %arg0[%c0, %c0_0] : memref<16x1xi32, #tpu.memory_space<vmem>>, vector<16x1xi32>
    %2 = vector.broadcast %1 : vector<16x1xi32> to vector<16x100xi32>
    %3 = arith.cmpi eq, %0, %2 : vector<16x100xi32>
    %4 = arith.extui %3 : vector<16x100xi1> to vector<16x100xi32>
    %5 = arith.sitofp %4 : vector<16x100xi32> to vector<16x100xf32>
    %c0_1 = arith.constant 0 : index
    %c0_2 = arith.constant 0 : index
    %6 = vector.load %arg1[%c0_1, %c0_2] : memref<100x32xf32, #tpu.memory_space<vmem>>, vector<100x32xf32>
    %cst = arith.constant dense<0.000000e+00> : vector<16x32xf32>
    %7 = tpu.matmul %5, %6, %cst {dimension_numbers = #tpu.dot_dimension_numbers<[1], [0], [0], [1], [0, 0, 1, 1], [], []>} : vector<16x100xf32>, vector<100x32xf32>, vector<16x32xf32> -> vector<16x32xf32>
    %c0_3 = arith.constant 0 : index
    %c0_4 = arith.constant 0 : index
    %8 = vector.load %arg2[%c0_3, %c0_4] : memref<16x32xf32, #tpu.memory_space<vmem>>, vector<8x32xf32>
    %9 = tpu.concatenate %8, %8 in 0 : vector<8x32xf32>, vector<8x32xf32> -> vector<16x32xf32>
    %10 = arith.addf %7, %9 : vector<16x32xf32>
    %c0_5 = arith.constant 0 : index
    %c0_6 = arith.constant 0 : index
    %11 = vector.load %arg3[%c0_5, %c0_6] : memref<2x32xf32, #tpu.memory_space<vmem>>, vector<1x32xf32>
    %12 = vector.broadcast %11 : vector<1x32xf32> to vector<16x32xf32>
    %13 = arith.addf %10, %12 : vector<16x32xf32>
    %c0_7 = arith.constant 0 : index
    %c0_8 = arith.constant 0 : index
    %14 = vector.load %arg4[%c0_7, %c0_8] : memref<1x32xf32, #tpu.memory_space<vmem>>, vector<1x32xf32>
    %c0_9 = arith.constant 0 : index
    %c0_10 = arith.constant 0 : index
    %15 = vector.load %arg5[%c0_9, %c0_10] : memref<1x32xf32, #tpu.memory_space<vmem>>, vector<1x32xf32>
    %cst_11 = arith.constant dense<0.000000e+00> : vector<16xf32>
    %16 = vector.multi_reduction <add>, %13, %cst_11 [1] : vector<16x32xf32> to vector<16xf32>
    %17 = vector.shape_cast %16 : vector<16xf32> to vector<16x1xf32>
    %cst_12 = arith.constant 3.200000e+01 : f32
    %18 = vector.broadcast %cst_12 : f32 to vector<16x1xf32>
    %19 = arith.divf %17, %18 : vector<16x1xf32>
    %20 = vector.broadcast %19 : vector<16x1xf32> to vector<16x32xf32>
    %21 = arith.subf %13, %20 : vector<16x32xf32>
    %22 = arith.mulf %21, %21 : vector<16x32xf32>
    %cst_13 = arith.constant dense<0.000000e+00> : vector<16xf32>
    %23 = vector.multi_reduction <add>, %22, %cst_13 [1] : vector<16x32xf32> to vector<16xf32>
    %24 = vector.shape_cast %23 : vector<16xf32> to vector<16x1xf32>
    %cst_14 = arith.constant 3.200000e+01 : f32
    %25 = vector.broadcast %cst_14 : f32 to vector<16x1xf32>
    %26 = arith.divf %24, %25 : vector<16x1xf32>
    %27 = vector.broadcast %19 : vector<16x1xf32> to vector<16x32xf32>
    %28 = arith.subf %13, %27 : vector<16x32xf32>
    %cst_15 = arith.constant 9.99999996E-13 : f32
    %29 = vector.broadcast %cst_15 : f32 to vector<16x1xf32>
    %30 = arith.addf %26, %29 : vector<16x1xf32>
    %31 = math.rsqrt %30 : vector<16x1xf32>
    %32 = vector.broadcast %31 : vector<16x1xf32> to vector<16x32xf32>
    %33 = arith.mulf %28, %32 : vector<16x32xf32>
    %34 = vector.broadcast %14 : vector<1x32xf32> to vector<16x32xf32>
    %35 = arith.mulf %33, %34 : vector<16x32xf32>
    %36 = vector.broadcast %15 : vector<1x32xf32> to vector<16x32xf32>
    %37 = arith.addf %35, %36 : vector<16x32xf32>
    %38 = tpu.iota {dimensions = array<i32: 0>} : vector<16x16xi32>
    %39 = tpu.iota {dimensions = array<i32: 1>} : vector<16x16xi32>
    %c3_i32 = arith.constant 3 : i32
    %40 = vector.broadcast %c3_i32 : i32 to vector<16x16xi32>
    %41 = arith.shrsi %38, %40 : vector<16x16xi32>
    %c3_i32_16 = arith.constant 3 : i32
    %42 = vector.broadcast %c3_i32_16 : i32 to vector<16x16xi32>
    %43 = arith.shrsi %39, %42 : vector<16x16xi32>
    %44 = arith.cmpi eq, %41, %43 : vector<16x16xi32>
    %cst_17 = arith.constant 0.000000e+00 : f32
    %cst_18 = arith.constant -1.000000e+30 : f32
    %45 = vector.broadcast %cst_17 : f32 to vector<16x16xf32>
    %46 = vector.broadcast %cst_18 : f32 to vector<16x16xf32>
    %47 = arith.select %44, %45, %46 : vector<16x16xi1>, vector<16x16xf32>
    %48 = arith.truncf %37 : vector<16x32xf32> to vector<16x32xbf16>
    %c0_19 = arith.constant 0 : index
    %c0_20 = arith.constant 0 : index
    %c0_21 = arith.constant 0 : index
    %49 = vector.load %arg6[%c0_19, %c0_20, %c0_21] : memref<2x32x96xbf16, #tpu.memory_space<vmem>>, vector<1x32x96xbf16>
    %50 = vector.shape_cast %49 : vector<1x32x96xbf16> to vector<32x96xbf16>
    %cst_22 = arith.constant dense<0.000000e+00> : vector<16x96xf32>
    %51 = tpu.matmul %48, %50, %cst_22 {dimension_numbers = #tpu.dot_dimension_numbers<[1], [0], [0], [1], [0, 0, 1, 1], [], []>} : vector<16x32xbf16>, vector<32x96xbf16>, vector<16x96xf32> -> vector<16x96xf32>
    %c0_23 = arith.constant 0 : index
    %c0_24 = arith.constant 0 : index
    %c0_25 = arith.constant 0 : index
    %52 = vector.load %arg7[%c0_23, %c0_24, %c0_25] : memref<2x1x96xf32, #tpu.memory_space<vmem>>, vector<1x1x96xf32>
    %53 = vector.shape_cast %52 : vector<1x1x96xf32> to vector<1x96xf32>
    %54 = vector.broadcast %53 : vector<1x96xf32> to vector<16x96xf32>
    %55 = arith.addf %51, %54 : vector<16x96xf32>
    %56 = vector.extract_strided_slice %55 {offsets = [0, 0], sizes = [16, 16], strides = [1, 1]} : vector<16x96xf32> to vector<16x16xf32>
    %57 = arith.truncf %56 : vector<16x16xf32> to vector<16x16xbf16>
    %58 = vector.extract_strided_slice %55 {offsets = [0, 32], sizes = [16, 16], strides = [1, 1]} : vector<16x96xf32> to vector<16x16xf32>
    %59 = arith.truncf %58 : vector<16x16xf32> to vector<16x16xbf16>
    %60 = vector.extract_strided_slice %55 {offsets = [0, 64], sizes = [16, 16], strides = [1, 1]} : vector<16x96xf32> to vector<16x16xf32>
    %61 = arith.truncf %60 : vector<16x16xf32> to vector<16x16xbf16>
    %cst_26 = arith.constant dense<0.000000e+00> : vector<16x16xf32>
    %62 = tpu.matmul %57, %59, %cst_26 {dimension_numbers = #tpu.dot_dimension_numbers<[1], [1], [0], [0], [0, 0, 1, 0], [], []>} : vector<16x16xbf16>, vector<16x16xbf16>, vector<16x16xf32> -> vector<16x16xf32>
    %63 = arith.addf %62, %47 : vector<16x16xf32>
    %cst_27 = arith.constant dense<0xFF800000> : vector<16xf32>
    %64 = vector.multi_reduction <maximumf>, %63, %cst_27 [1] : vector<16x16xf32> to vector<16xf32>
    %65 = vector.shape_cast %64 : vector<16xf32> to vector<16x1xf32>
    %66 = vector.broadcast %65 : vector<16x1xf32> to vector<16x16xf32>
    %67 = arith.subf %63, %66 : vector<16x16xf32>
    %68 = math.exp %67 : vector<16x16xf32>
    %cst_28 = arith.constant dense<0.000000e+00> : vector<16xf32>
    %69 = vector.multi_reduction <add>, %68, %cst_28 [1] : vector<16x16xf32> to vector<16xf32>
    %70 = vector.shape_cast %69 : vector<16xf32> to vector<16x1xf32>
    %71 = vector.broadcast %70 : vector<16x1xf32> to vector<16x16xf32>
    %72 = arith.divf %68, %71 : vector<16x16xf32>
    %73 = arith.truncf %72 : vector<16x16xf32> to vector<16x16xbf16>
    %cst_29 = arith.constant dense<0.000000e+00> : vector<16x16xf32>
    %74 = tpu.matmul %73, %61, %cst_29 {dimension_numbers = #tpu.dot_dimension_numbers<[1], [0], [0], [1], [0, 0, 1, 1], [], []>} : vector<16x16xbf16>, vector<16x16xbf16>, vector<16x16xf32> -> vector<16x16xf32>
    %75 = vector.extract_strided_slice %55 {offsets = [0, 16], sizes = [16, 16], strides = [1, 1]} : vector<16x96xf32> to vector<16x16xf32>
    %76 = arith.truncf %75 : vector<16x16xf32> to vector<16x16xbf16>
    %77 = vector.extract_strided_slice %55 {offsets = [0, 48], sizes = [16, 16], strides = [1, 1]} : vector<16x96xf32> to vector<16x16xf32>
    %78 = arith.truncf %77 : vector<16x16xf32> to vector<16x16xbf16>
    %79 = vector.extract_strided_slice %55 {offsets = [0, 80], sizes = [16, 16], strides = [1, 1]} : vector<16x96xf32> to vector<16x16xf32>
    %80 = arith.truncf %79 : vector<16x16xf32> to vector<16x16xbf16>
    %cst_30 = arith.constant dense<0.000000e+00> : vector<16x16xf32>
    %81 = tpu.matmul %76, %78, %cst_30 {dimension_numbers = #tpu.dot_dimension_numbers<[1], [1], [0], [0], [0, 0, 1, 0], [], []>} : vector<16x16xbf16>, vector<16x16xbf16>, vector<16x16xf32> -> vector<16x16xf32>
    %82 = arith.addf %81, %47 : vector<16x16xf32>
    %cst_31 = arith.constant dense<0xFF800000> : vector<16xf32>
    %83 = vector.multi_reduction <maximumf>, %82, %cst_31 [1] : vector<16x16xf32> to vector<16xf32>
    %84 = vector.shape_cast %83 : vector<16xf32> to vector<16x1xf32>
    %85 = vector.broadcast %84 : vector<16x1xf32> to vector<16x16xf32>
    %86 = arith.subf %82, %85 : vector<16x16xf32>
    %87 = math.exp %86 : vector<16x16xf32>
    %cst_32 = arith.constant dense<0.000000e+00> : vector<16xf32>
    %88 = vector.multi_reduction <add>, %87, %cst_32 [1] : vector<16x16xf32> to vector<16xf32>
    %89 = vector.shape_cast %88 : vector<16xf32> to vector<16x1xf32>
    %90 = vector.broadcast %89 : vector<16x1xf32> to vector<16x16xf32>
    %91 = arith.divf %87, %90 : vector<16x16xf32>
    %92 = arith.truncf %91 : vector<16x16xf32> to vector<16x16xbf16>
    %cst_33 = arith.constant dense<0.000000e+00> : vector<16x16xf32>
    %93 = tpu.matmul %92, %80, %cst_33 {dimension_numbers = #tpu.dot_dimension_numbers<[1], [0], [0], [1], [0, 0, 1, 1], [], []>} : vector<16x16xbf16>, vector<16x16xbf16>, vector<16x16xf32> -> vector<16x16xf32>
    %94 = tpu.concatenate %74, %93 in 1 : vector<16x16xf32>, vector<16x16xf32> -> vector<16x32xf32>
    %95 = arith.truncf %94 : vector<16x32xf32> to vector<16x32xbf16>
    %c0_34 = arith.constant 0 : index
    %c0_35 = arith.constant 0 : index
    %c0_36 = arith.constant 0 : index
    %96 = vector.load %arg8[%c0_34, %c0_35, %c0_36] : memref<2x32x32xbf16, #tpu.memory_space<vmem>>, vector<1x32x32xbf16>
    %97 = vector.shape_cast %96 : vector<1x32x32xbf16> to vector<32x32xbf16>
    %cst_37 = arith.constant dense<0.000000e+00> : vector<16x32xf32>
    %98 = tpu.matmul %95, %97, %cst_37 {dimension_numbers = #tpu.dot_dimension_numbers<[1], [0], [0], [1], [0, 0, 1, 1], [], []>} : vector<16x32xbf16>, vector<32x32xbf16>, vector<16x32xf32> -> vector<16x32xf32>
    %c0_38 = arith.constant 0 : index
    %c0_39 = arith.constant 0 : index
    %c0_40 = arith.constant 0 : index
    %99 = vector.load %arg9[%c0_38, %c0_39, %c0_40] : memref<2x1x32xf32, #tpu.memory_space<vmem>>, vector<1x1x32xf32>
    %100 = vector.shape_cast %99 : vector<1x1x32xf32> to vector<1x32xf32>
    %101 = vector.broadcast %100 : vector<1x32xf32> to vector<16x32xf32>
    %102 = arith.addf %98, %101 : vector<16x32xf32>
    %103 = arith.addf %37, %102 : vector<16x32xf32>
    %c0_41 = arith.constant 0 : index
    %c0_42 = arith.constant 0 : index
    %c0_43 = arith.constant 0 : index
    %104 = vector.load %arg10[%c0_41, %c0_42, %c0_43] : memref<2x1x32xf32, #tpu.memory_space<vmem>>, vector<1x1x32xf32>
    %105 = vector.shape_cast %104 : vector<1x1x32xf32> to vector<1x32xf32>
    %c0_44 = arith.constant 0 : index
    %c0_45 = arith.constant 0 : index
    %c0_46 = arith.constant 0 : index
    %106 = vector.load %arg11[%c0_44, %c0_45, %c0_46] : memref<2x1x32xf32, #tpu.memory_space<vmem>>, vector<1x1x32xf32>
    %107 = vector.shape_cast %106 : vector<1x1x32xf32> to vector<1x32xf32>
    %cst_47 = arith.constant dense<0.000000e+00> : vector<16xf32>
    %108 = vector.multi_reduction <add>, %103, %cst_47 [1] : vector<16x32xf32> to vector<16xf32>
    %109 = vector.shape_cast %108 : vector<16xf32> to vector<16x1xf32>
    %cst_48 = arith.constant 3.200000e+01 : f32
    %110 = vector.broadcast %cst_48 : f32 to vector<16x1xf32>
    %111 = arith.divf %109, %110 : vector<16x1xf32>
    %112 = vector.broadcast %111 : vector<16x1xf32> to vector<16x32xf32>
    %113 = arith.subf %103, %112 : vector<16x32xf32>
    %114 = arith.mulf %113, %113 : vector<16x32xf32>
    %cst_49 = arith.constant dense<0.000000e+00> : vector<16xf32>
    %115 = vector.multi_reduction <add>, %114, %cst_49 [1] : vector<16x32xf32> to vector<16xf32>
    %116 = vector.shape_cast %115 : vector<16xf32> to vector<16x1xf32>
    %cst_50 = arith.constant 3.200000e+01 : f32
    %117 = vector.broadcast %cst_50 : f32 to vector<16x1xf32>
    %118 = arith.divf %116, %117 : vector<16x1xf32>
    %119 = vector.broadcast %111 : vector<16x1xf32> to vector<16x32xf32>
    %120 = arith.subf %103, %119 : vector<16x32xf32>
    %cst_51 = arith.constant 9.99999996E-13 : f32
    %121 = vector.broadcast %cst_51 : f32 to vector<16x1xf32>
    %122 = arith.addf %118, %121 : vector<16x1xf32>
    %123 = math.rsqrt %122 : vector<16x1xf32>
    %124 = vector.broadcast %123 : vector<16x1xf32> to vector<16x32xf32>
    %125 = arith.mulf %120, %124 : vector<16x32xf32>
    %126 = vector.broadcast %105 : vector<1x32xf32> to vector<16x32xf32>
    %127 = arith.mulf %125, %126 : vector<16x32xf32>
    %128 = vector.broadcast %107 : vector<1x32xf32> to vector<16x32xf32>
    %129 = arith.addf %127, %128 : vector<16x32xf32>
    %130 = arith.truncf %129 : vector<16x32xf32> to vector<16x32xbf16>
    %c0_52 = arith.constant 0 : index
    %c0_53 = arith.constant 0 : index
    %c0_54 = arith.constant 0 : index
    %131 = vector.load %arg12[%c0_52, %c0_53, %c0_54] : memref<2x32x64xbf16, #tpu.memory_space<vmem>>, vector<1x32x64xbf16>
    %132 = vector.shape_cast %131 : vector<1x32x64xbf16> to vector<32x64xbf16>
    %cst_55 = arith.constant dense<0.000000e+00> : vector<16x64xf32>
    %133 = tpu.matmul %130, %132, %cst_55 {dimension_numbers = #tpu.dot_dimension_numbers<[1], [0], [0], [1], [0, 0, 1, 1], [], []>} : vector<16x32xbf16>, vector<32x64xbf16>, vector<16x64xf32> -> vector<16x64xf32>
    %c0_56 = arith.constant 0 : index
    %c0_57 = arith.constant 0 : index
    %c0_58 = arith.constant 0 : index
    %134 = vector.load %arg13[%c0_56, %c0_57, %c0_58] : memref<2x1x64xf32, #tpu.memory_space<vmem>>, vector<1x1x64xf32>
    %135 = vector.shape_cast %134 : vector<1x1x64xf32> to vector<1x64xf32>
    %136 = vector.broadcast %135 : vector<1x64xf32> to vector<16x64xf32>
    %137 = arith.addf %133, %136 : vector<16x64xf32>
    %cst_59 = arith.constant 5.000000e-01 : f32
    %138 = vector.broadcast %cst_59 : f32 to vector<16x64xf32>
    %139 = arith.mulf %138, %137 : vector<16x64xf32>
    %cst_60 = arith.constant 4.471500e-02 : f32
    %140 = vector.broadcast %cst_60 : f32 to vector<16x64xf32>
    %141 = arith.mulf %140, %137 : vector<16x64xf32>
    %142 = arith.mulf %141, %137 : vector<16x64xf32>
    %143 = arith.mulf %142, %137 : vector<16x64xf32>
    %144 = arith.addf %137, %143 : vector<16x64xf32>
    %cst_61 = arith.constant 0.797884583 : f32
    %145 = vector.broadcast %cst_61 : f32 to vector<16x64xf32>
    %146 = arith.mulf %145, %144 : vector<16x64xf32>
    %147 = math.tanh %146 : vector<16x64xf32>
    %cst_62 = arith.constant 1.000000e+00 : f32
    %148 = vector.broadcast %cst_62 : f32 to vector<16x64xf32>
    %149 = arith.addf %148, %147 : vector<16x64xf32>
    %150 = arith.mulf %139, %149 : vector<16x64xf32>
    %151 = arith.truncf %150 : vector<16x64xf32> to vector<16x64xbf16>
    %c0_63 = arith.constant 0 : index
    %c0_64 = arith.constant 0 : index
    %c0_65 = arith.constant 0 : index
    %152 = vector.load %arg14[%c0_63, %c0_64, %c0_65] : memref<2x64x32xbf16, #tpu.memory_space<vmem>>, vector<1x64x32xbf16>
    %153 = vector.shape_cast %152 : vector<1x64x32xbf16> to vector<64x32xbf16>
    %cst_66 = arith.constant dense<0.000000e+00> : vector<16x32xf32>
    %154 = tpu.matmul %151, %153, %cst_66 {dimension_numbers = #tpu.dot_dimension_numbers<[1], [0], [0], [1], [0, 0, 1, 1], [], []>} : vector<16x64xbf16>, vector<64x32xbf16>, vector<16x32xf32> -> vector<16x32xf32>
    %c0_67 = arith.constant 0 : index
    %c0_68 = arith.constant 0 : index
    %c0_69 = arith.constant 0 : index
    %155 = vector.load %arg15[%c0_67, %c0_68, %c0_69] : memref<2x1x32xf32, #tpu.memory_space<vmem>>, vector<1x1x32xf32>
    %156 = vector.shape_cast %155 : vector<1x1x32xf32> to vector<1x32xf32>
    %157 = vector.broadcast %156 : vector<1x32xf32> to vector<16x32xf32>
    %158 = arith.addf %154, %157 : vector<16x32xf32>
    %159 = arith.addf %129, %158 : vector<16x32xf32>
    %c0_70 = arith.constant 0 : index
    %c0_71 = arith.constant 0 : index
    %c0_72 = arith.constant 0 : index
    %160 = vector.load %arg16[%c0_70, %c0_71, %c0_72] : memref<2x1x32xf32, #tpu.memory_space<vmem>>, vector<1x1x32xf32>
    %161 = vector.shape_cast %160 : vector<1x1x32xf32> to vector<1x32xf32>
    %c0_73 = arith.constant 0 : index
    %c0_74 = arith.constant 0 : index
    %c0_75 = arith.constant 0 : index
    %162 = vector.load %arg17[%c0_73, %c0_74, %c0_75] : memref<2x1x32xf32, #tpu.memory_space<vmem>>, vector<1x1x32xf32>
    %163 = vector.shape_cast %162 : vector<1x1x32xf32> to vector<1x32xf32>
    %cst_76 = arith.constant dense<0.000000e+00> : vector<16xf32>
    %164 = vector.multi_reduction <add>, %159, %cst_76 [1] : vector<16x32xf32> to vector<16xf32>
    %165 = vector.shape_cast %164 : vector<16xf32> to vector<16x1xf32>
    %cst_77 = arith.constant 3.200000e+01 : f32
    %166 = vector.broadcast %cst_77 : f32 to vector<16x1xf32>
    %167 = arith.divf %165, %166 : vector<16x1xf32>
    %168 = vector.broadcast %167 : vector<16x1xf32> to vector<16x32xf32>
    %169 = arith.subf %159, %168 : vector<16x32xf32>
    %170 = arith.mulf %169, %169 : vector<16x32xf32>
    %cst_78 = arith.constant dense<0.000000e+00> : vector<16xf32>
    %171 = vector.multi_reduction <add>, %170, %cst_78 [1] : vector<16x32xf32> to vector<16xf32>
    %172 = vector.shape_cast %171 : vector<16xf32> to vector<16x1xf32>
    %cst_79 = arith.constant 3.200000e+01 : f32
    %173 = vector.broadcast %cst_79 : f32 to vector<16x1xf32>
    %174 = arith.divf %172, %173 : vector<16x1xf32>
    %175 = vector.broadcast %167 : vector<16x1xf32> to vector<16x32xf32>
    %176 = arith.subf %159, %175 : vector<16x32xf32>
    %cst_80 = arith.constant 9.99999996E-13 : f32
    %177 = vector.broadcast %cst_80 : f32 to vector<16x1xf32>
    %178 = arith.addf %174, %177 : vector<16x1xf32>
    %179 = math.rsqrt %178 : vector<16x1xf32>
    %180 = vector.broadcast %179 : vector<16x1xf32> to vector<16x32xf32>
    %181 = arith.mulf %176, %180 : vector<16x32xf32>
    %182 = vector.broadcast %161 : vector<1x32xf32> to vector<16x32xf32>
    %183 = arith.mulf %181, %182 : vector<16x32xf32>
    %184 = vector.broadcast %163 : vector<1x32xf32> to vector<16x32xf32>
    %185 = arith.addf %183, %184 : vector<16x32xf32>
    %186 = arith.truncf %185 : vector<16x32xf32> to vector<16x32xbf16>
    %c1 = arith.constant 1 : index
    %c0_81 = arith.constant 0 : index
    %c0_82 = arith.constant 0 : index
    %187 = vector.load %arg6[%c1, %c0_81, %c0_82] : memref<2x32x96xbf16, #tpu.memory_space<vmem>>, vector<1x32x96xbf16>
    %188 = vector.shape_cast %187 : vector<1x32x96xbf16> to vector<32x96xbf16>
    %cst_83 = arith.constant dense<0.000000e+00> : vector<16x96xf32>
    %189 = tpu.matmul %186, %188, %cst_83 {dimension_numbers = #tpu.dot_dimension_numbers<[1], [0], [0], [1], [0, 0, 1, 1], [], []>} : vector<16x32xbf16>, vector<32x96xbf16>, vector<16x96xf32> -> vector<16x96xf32>
    %c1_84 = arith.constant 1 : index
    %c0_85 = arith.constant 0 : index
    %c0_86 = arith.constant 0 : index
    %190 = vector.load %arg7[%c1_84, %c0_85, %c0_86] : memref<2x1x96xf32, #tpu.memory_space<vmem>>, vector<1x1x96xf32>
    %191 = vector.shape_cast %190 : vector<1x1x96xf32> to vector<1x96xf32>
    %192 = vector.broadcast %191 : vector<1x96xf32> to vector<16x96xf32>
    %193 = arith.addf %189, %192 : vector<16x96xf32>
    %194 = vector.extract_strided_slice %193 {offsets = [0, 0], sizes = [16, 16], strides = [1, 1]} : vector<16x96xf32> to vector<16x16xf32>
    %195 = arith.truncf %194 : vector<16x16xf32> to vector<16x16xbf16>
    %196 = vector.extract_strided_slice %193 {offsets = [0, 32], sizes = [16, 16], strides = [1, 1]} : vector<16x96xf32> to vector<16x16xf32>
    %197 = arith.truncf %196 : vector<16x16xf32> to vector<16x16xbf16>
    %198 = vector.extract_strided_slice %193 {offsets = [0, 64], sizes = [16, 16], strides = [1, 1]} : vector<16x96xf32> to vector<16x16xf32>
    %199 = arith.truncf %198 : vector<16x16xf32> to vector<16x16xbf16>
    %cst_87 = arith.constant dense<0.000000e+00> : vector<16x16xf32>
    %200 = tpu.matmul %195, %197, %cst_87 {dimension_numbers = #tpu.dot_dimension_numbers<[1], [1], [0], [0], [0, 0, 1, 0], [], []>} : vector<16x16xbf16>, vector<16x16xbf16>, vector<16x16xf32> -> vector<16x16xf32>
    %201 = arith.addf %200, %47 : vector<16x16xf32>
    %cst_88 = arith.constant dense<0xFF800000> : vector<16xf32>
    %202 = vector.multi_reduction <maximumf>, %201, %cst_88 [1] : vector<16x16xf32> to vector<16xf32>
    %203 = vector.shape_cast %202 : vector<16xf32> to vector<16x1xf32>
    %204 = vector.broadcast %203 : vector<16x1xf32> to vector<16x16xf32>
    %205 = arith.subf %201, %204 : vector<16x16xf32>
    %206 = math.exp %205 : vector<16x16xf32>
    %cst_89 = arith.constant dense<0.000000e+00> : vector<16xf32>
    %207 = vector.multi_reduction <add>, %206, %cst_89 [1] : vector<16x16xf32> to vector<16xf32>
    %208 = vector.shape_cast %207 : vector<16xf32> to vector<16x1xf32>
    %209 = vector.broadcast %208 : vector<16x1xf32> to vector<16x16xf32>
    %210 = arith.divf %206, %209 : vector<16x16xf32>
    %211 = arith.truncf %210 : vector<16x16xf32> to vector<16x16xbf16>
    %cst_90 = arith.constant dense<0.000000e+00> : vector<16x16xf32>
    %212 = tpu.matmul %211, %199, %cst_90 {dimension_numbers = #tpu.dot_dimension_numbers<[1], [0], [0], [1], [0, 0, 1, 1], [], []>} : vector<16x16xbf16>, vector<16x16xbf16>, vector<16x16xf32> -> vector<16x16xf32>
    %213 = vector.extract_strided_slice %193 {offsets = [0, 16], sizes = [16, 16], strides = [1, 1]} : vector<16x96xf32> to vector<16x16xf32>
    %214 = arith.truncf %213 : vector<16x16xf32> to vector<16x16xbf16>
    %215 = vector.extract_strided_slice %193 {offsets = [0, 48], sizes = [16, 16], strides = [1, 1]} : vector<16x96xf32> to vector<16x16xf32>
    %216 = arith.truncf %215 : vector<16x16xf32> to vector<16x16xbf16>
    %217 = vector.extract_strided_slice %193 {offsets = [0, 80], sizes = [16, 16], strides = [1, 1]} : vector<16x96xf32> to vector<16x16xf32>
    %218 = arith.truncf %217 : vector<16x16xf32> to vector<16x16xbf16>
    %cst_91 = arith.constant dense<0.000000e+00> : vector<16x16xf32>
    %219 = tpu.matmul %214, %216, %cst_91 {dimension_numbers = #tpu.dot_dimension_numbers<[1], [1], [0], [0], [0, 0, 1, 0], [], []>} : vector<16x16xbf16>, vector<16x16xbf16>, vector<16x16xf32> -> vector<16x16xf32>
    %220 = arith.addf %219, %47 : vector<16x16xf32>
    %cst_92 = arith.constant dense<0xFF800000> : vector<16xf32>
    %221 = vector.multi_reduction <maximumf>, %220, %cst_92 [1] : vector<16x16xf32> to vector<16xf32>
    %222 = vector.shape_cast %221 : vector<16xf32> to vector<16x1xf32>
    %223 = vector.broadcast %222 : vector<16x1xf32> to vector<16x16xf32>
    %224 = arith.subf %220, %223 : vector<16x16xf32>
    %225 = math.exp %224 : vector<16x16xf32>
    %cst_93 = arith.constant dense<0.000000e+00> : vector<16xf32>
    %226 = vector.multi_reduction <add>, %225, %cst_93 [1] : vector<16x16xf32> to vector<16xf32>
    %227 = vector.shape_cast %226 : vector<16xf32> to vector<16x1xf32>
    %228 = vector.broadcast %227 : vector<16x1xf32> to vector<16x16xf32>
    %229 = arith.divf %225, %228 : vector<16x16xf32>
    %230 = arith.truncf %229 : vector<16x16xf32> to vector<16x16xbf16>
    %cst_94 = arith.constant dense<0.000000e+00> : vector<16x16xf32>
    %231 = tpu.matmul %230, %218, %cst_94 {dimension_numbers = #tpu.dot_dimension_numbers<[1], [0], [0], [1], [0, 0, 1, 1], [], []>} : vector<16x16xbf16>, vector<16x16xbf16>, vector<16x16xf32> -> vector<16x16xf32>
    %232 = tpu.concatenate %212, %231 in 1 : vector<16x16xf32>, vector<16x16xf32> -> vector<16x32xf32>
    %233 = arith.truncf %232 : vector<16x32xf32> to vector<16x32xbf16>
    %c1_95 = arith.constant 1 : index
    %c0_96 = arith.constant 0 : index
    %c0_97 = arith.constant 0 : index
    %234 = vector.load %arg8[%c1_95, %c0_96, %c0_97] : memref<2x32x32xbf16, #tpu.memory_space<vmem>>, vector<1x32x32xbf16>
    %235 = vector.shape_cast %234 : vector<1x32x32xbf16> to vector<32x32xbf16>
    %cst_98 = arith.constant dense<0.000000e+00> : vector<16x32xf32>
    %236 = tpu.matmul %233, %235, %cst_98 {dimension_numbers = #tpu.dot_dimension_numbers<[1], [0], [0], [1], [0, 0, 1, 1], [], []>} : vector<16x32xbf16>, vector<32x32xbf16>, vector<16x32xf32> -> vector<16x32xf32>
    %c1_99 = arith.constant 1 : index
    %c0_100 = arith.constant 0 : index
    %c0_101 = arith.constant 0 : index
    %237 = vector.load %arg9[%c1_99, %c0_100, %c0_101] : memref<2x1x32xf32, #tpu.memory_space<vmem>>, vector<1x1x32xf32>
    %238 = vector.shape_cast %237 : vector<1x1x32xf32> to vector<1x32xf32>
    %239 = vector.broadcast %238 : vector<1x32xf32> to vector<16x32xf32>
    %240 = arith.addf %236, %239 : vector<16x32xf32>
    %241 = arith.addf %185, %240 : vector<16x32xf32>
    %c1_102 = arith.constant 1 : index
    %c0_103 = arith.constant 0 : index
    %c0_104 = arith.constant 0 : index
    %242 = vector.load %arg10[%c1_102, %c0_103, %c0_104] : memref<2x1x32xf32, #tpu.memory_space<vmem>>, vector<1x1x32xf32>
    %243 = vector.shape_cast %242 : vector<1x1x32xf32> to vector<1x32xf32>
    %c1_105 = arith.constant 1 : index
    %c0_106 = arith.constant 0 : index
    %c0_107 = arith.constant 0 : index
    %244 = vector.load %arg11[%c1_105, %c0_106, %c0_107] : memref<2x1x32xf32, #tpu.memory_space<vmem>>, vector<1x1x32xf32>
    %245 = vector.shape_cast %244 : vector<1x1x32xf32> to vector<1x32xf32>
    %cst_108 = arith.constant dense<0.000000e+00> : vector<16xf32>
    %246 = vector.multi_reduction <add>, %241, %cst_108 [1] : vector<16x32xf32> to vector<16xf32>
    %247 = vector.shape_cast %246 : vector<16xf32> to vector<16x1xf32>
    %cst_109 = arith.constant 3.200000e+01 : f32
    %248 = vector.broadcast %cst_109 : f32 to vector<16x1xf32>
    %249 = arith.divf %247, %248 : vector<16x1xf32>
    %250 = vector.broadcast %249 : vector<16x1xf32> to vector<16x32xf32>
    %251 = arith.subf %241, %250 : vector<16x32xf32>
    %252 = arith.mulf %251, %251 : vector<16x32xf32>
    %cst_110 = arith.constant dense<0.000000e+00> : vector<16xf32>
    %253 = vector.multi_reduction <add>, %252, %cst_110 [1] : vector<16x32xf32> to vector<16xf32>
    %254 = vector.shape_cast %253 : vector<16xf32> to vector<16x1xf32>
    %cst_111 = arith.constant 3.200000e+01 : f32
    %255 = vector.broadcast %cst_111 : f32 to vector<16x1xf32>
    %256 = arith.divf %254, %255 : vector<16x1xf32>
    %257 = vector.broadcast %249 : vector<16x1xf32> to vector<16x32xf32>
    %258 = arith.subf %241, %257 : vector<16x32xf32>
    %cst_112 = arith.constant 9.99999996E-13 : f32
    %259 = vector.broadcast %cst_112 : f32 to vector<16x1xf32>
    %260 = arith.addf %256, %259 : vector<16x1xf32>
    %261 = math.rsqrt %260 : vector<16x1xf32>
    %262 = vector.broadcast %261 : vector<16x1xf32> to vector<16x32xf32>
    %263 = arith.mulf %258, %262 : vector<16x32xf32>
    %264 = vector.broadcast %243 : vector<1x32xf32> to vector<16x32xf32>
    %265 = arith.mulf %263, %264 : vector<16x32xf32>
    %266 = vector.broadcast %245 : vector<1x32xf32> to vector<16x32xf32>
    %267 = arith.addf %265, %266 : vector<16x32xf32>
    %268 = arith.truncf %267 : vector<16x32xf32> to vector<16x32xbf16>
    %c1_113 = arith.constant 1 : index
    %c0_114 = arith.constant 0 : index
    %c0_115 = arith.constant 0 : index
    %269 = vector.load %arg12[%c1_113, %c0_114, %c0_115] : memref<2x32x64xbf16, #tpu.memory_space<vmem>>, vector<1x32x64xbf16>
    %270 = vector.shape_cast %269 : vector<1x32x64xbf16> to vector<32x64xbf16>
    %cst_116 = arith.constant dense<0.000000e+00> : vector<16x64xf32>
    %271 = tpu.matmul %268, %270, %cst_116 {dimension_numbers = #tpu.dot_dimension_numbers<[1], [0], [0], [1], [0, 0, 1, 1], [], []>} : vector<16x32xbf16>, vector<32x64xbf16>, vector<16x64xf32> -> vector<16x64xf32>
    %c1_117 = arith.constant 1 : index
    %c0_118 = arith.constant 0 : index
    %c0_119 = arith.constant 0 : index
    %272 = vector.load %arg13[%c1_117, %c0_118, %c0_119] : memref<2x1x64xf32, #tpu.memory_space<vmem>>, vector<1x1x64xf32>
    %273 = vector.shape_cast %272 : vector<1x1x64xf32> to vector<1x64xf32>
    %274 = vector.broadcast %273 : vector<1x64xf32> to vector<16x64xf32>
    %275 = arith.addf %271, %274 : vector<16x64xf32>
    %cst_120 = arith.constant 5.000000e-01 : f32
    %276 = vector.broadcast %cst_120 : f32 to vector<16x64xf32>
    %277 = arith.mulf %276, %275 : vector<16x64xf32>
    %cst_121 = arith.constant 4.471500e-02 : f32
    %278 = vector.broadcast %cst_121 : f32 to vector<16x64xf32>
    %279 = arith.mulf %278, %275 : vector<16x64xf32>
    %280 = arith.mulf %279, %275 : vector<16x64xf32>
    %281 = arith.mulf %280, %275 : vector<16x64xf32>
    %282 = arith.addf %275, %281 : vector<16x64xf32>
    %cst_122 = arith.constant 0.797884583 : f32
    %283 = vector.broadcast %cst_122 : f32 to vector<16x64xf32>
    %284 = arith.mulf %283, %282 : vector<16x64xf32>
    %285 = math.tanh %284 : vector<16x64xf32>
    %cst_123 = arith.constant 1.000000e+00 : f32
    %286 = vector.broadcast %cst_123 : f32 to vector<16x64xf32>
    %287 = arith.addf %286, %285 : vector<16x64xf32>
    %288 = arith.mulf %277, %287 : vector<16x64xf32>
    %289 = arith.truncf %288 : vector<16x64xf32> to vector<16x64xbf16>
    %c1_124 = arith.constant 1 : index
    %c0_125 = arith.constant 0 : index
    %c0_126 = arith.constant 0 : index
    %290 = vector.load %arg14[%c1_124, %c0_125, %c0_126] : memref<2x64x32xbf16, #tpu.memory_space<vmem>>, vector<1x64x32xbf16>
    %291 = vector.shape_cast %290 : vector<1x64x32xbf16> to vector<64x32xbf16>
    %cst_127 = arith.constant dense<0.000000e+00> : vector<16x32xf32>
    %292 = tpu.matmul %289, %291, %cst_127 {dimension_numbers = #tpu.dot_dimension_numbers<[1], [0], [0], [1], [0, 0, 1, 1], [], []>} : vector<16x64xbf16>, vector<64x32xbf16>, vector<16x32xf32> -> vector<16x32xf32>
    %c1_128 = arith.constant 1 : index
    %c0_129 = arith.constant 0 : index
    %c0_130 = arith.constant 0 : index
    %293 = vector.load %arg15[%c1_128, %c0_129, %c0_130] : memref<2x1x32xf32, #tpu.memory_space<vmem>>, vector<1x1x32xf32>
    %294 = vector.shape_cast %293 : vector<1x1x32xf32> to vector<1x32xf32>
    %295 = vector.broadcast %294 : vector<1x32xf32> to vector<16x32xf32>
    %296 = arith.addf %292, %295 : vector<16x32xf32>
    %297 = arith.addf %267, %296 : vector<16x32xf32>
    %c1_131 = arith.constant 1 : index
    %c0_132 = arith.constant 0 : index
    %c0_133 = arith.constant 0 : index
    %298 = vector.load %arg16[%c1_131, %c0_132, %c0_133] : memref<2x1x32xf32, #tpu.memory_space<vmem>>, vector<1x1x32xf32>
    %299 = vector.shape_cast %298 : vector<1x1x32xf32> to vector<1x32xf32>
    %c1_134 = arith.constant 1 : index
    %c0_135 = arith.constant 0 : index
    %c0_136 = arith.constant 0 : index
    %300 = vector.load %arg17[%c1_134, %c0_135, %c0_136] : memref<2x1x32xf32, #tpu.memory_space<vmem>>, vector<1x1x32xf32>
    %301 = vector.shape_cast %300 : vector<1x1x32xf32> to vector<1x32xf32>
    %cst_137 = arith.constant dense<0.000000e+00> : vector<16xf32>
    %302 = vector.multi_reduction <add>, %297, %cst_137 [1] : vector<16x32xf32> to vector<16xf32>
    %303 = vector.shape_cast %302 : vector<16xf32> to vector<16x1xf32>
    %cst_138 = arith.constant 3.200000e+01 : f32
    %304 = vector.broadcast %cst_138 : f32 to vector<16x1xf32>
    %305 = arith.divf %303, %304 : vector<16x1xf32>
    %306 = vector.broadcast %305 : vector<16x1xf32> to vector<16x32xf32>
    %307 = arith.subf %297, %306 : vector<16x32xf32>
    %308 = arith.mulf %307, %307 : vector<16x32xf32>
    %cst_139 = arith.constant dense<0.000000e+00> : vector<16xf32>
    %309 = vector.multi_reduction <add>, %308, %cst_139 [1] : vector<16x32xf32> to vector<16xf32>
    %310 = vector.shape_cast %309 : vector<16xf32> to vector<16x1xf32>
    %cst_140 = arith.constant 3.200000e+01 : f32
    %311 = vector.broadcast %cst_140 : f32 to vector<16x1xf32>
    %312 = arith.divf %310, %311 : vector<16x1xf32>
    %313 = vector.broadcast %305 : vector<16x1xf32> to vector<16x32xf32>
    %314 = arith.subf %297, %313 : vector<16x32xf32>
    %cst_141 = arith.constant 9.99999996E-13 : f32
    %315 = vector.broadcast %cst_141 : f32 to vector<16x1xf32>
    %316 = arith.addf %312, %315 : vector<16x1xf32>
    %317 = math.rsqrt %316 : vector<16x1xf32>
    %318 = vector.broadcast %317 : vector<16x1xf32> to vector<16x32xf32>
    %319 = arith.mulf %314, %318 : vector<16x32xf32>
    %320 = vector.broadcast %299 : vector<1x32xf32> to vector<16x32xf32>
    %321 = arith.mulf %319, %320 : vector<16x32xf32>
    %322 = vector.broadcast %301 : vector<1x32xf32> to vector<16x32xf32>
    %323 = arith.addf %321, %322 : vector<16x32xf32>
    %324 = vector.extract_strided_slice %323 {offsets = [0, 0], sizes = [1, 32], strides = [1, 1]} : vector<16x32xf32> to vector<1x32xf32>
    %325 = vector.extract_strided_slice %323 {offsets = [8, 0], sizes = [1, 32], strides = [1, 1]} : vector<16x32xf32> to vector<1x32xf32>
    %326 = tpu.concatenate %324, %325 in 0 : vector<1x32xf32>, vector<1x32xf32> -> vector<2x32xf32>
    %327 = arith.truncf %326 : vector<2x32xf32> to vector<2x32xbf16>
    %c0_142 = arith.constant 0 : index
    %c0_143 = arith.constant 0 : index
    %328 = vector.load %arg18[%c0_142, %c0_143] : memref<32x32xbf16, #tpu.memory_space<vmem>>, vector<32x32xbf16>
    %cst_144 = arith.constant dense<0.000000e+00> : vector<2x32xf32>
    %329 = tpu.matmul %327, %328, %cst_144 {dimension_numbers = #tpu.dot_dimension_numbers<[1], [0], [0], [1], [0, 0, 1, 1], [], []>} : vector<2x32xbf16>, vector<32x32xbf16>, vector<2x32xf32> -> vector<2x32xf32>
    %c0_145 = arith.constant 0 : index
    %c0_146 = arith.constant 0 : index
    %330 = vector.load %arg19[%c0_145, %c0_146] : memref<1x32xf32, #tpu.memory_space<vmem>>, vector<1x32xf32>
    %331 = vector.broadcast %330 : vector<1x32xf32> to vector<2x32xf32>
    %332 = arith.addf %329, %331 : vector<2x32xf32>
    %333 = math.tanh %332 : vector<2x32xf32>
    %334 = arith.truncf %333 : vector<2x32xf32> to vector<2x32xbf16>
    %c0_147 = arith.constant 0 : index
    %c0_148 = arith.constant 0 : index
    %335 = vector.load %arg20[%c0_147, %c0_148] : memref<32x2xbf16, #tpu.memory_space<vmem>>, vector<32x2xbf16>
    %cst_149 = arith.constant dense<0.000000e+00> : vector<2x2xf32>
    %336 = tpu.matmul %334, %335, %cst_149 {dimension_numbers = #tpu.dot_dimension_numbers<[1], [0], [0], [1], [0, 0, 1, 1], [], []>} : vector<2x32xbf16>, vector<32x2xbf16>, vector<2x2xf32> -> vector<2x2xf32>
    %c0_150 = arith.constant 0 : index
    %c0_151 = arith.constant 0 : index
    %337 = vector.load %arg21[%c0_150, %c0_151] : memref<1x2xf32, #tpu.memory_space<vmem>>, vector<1x2xf32>
    %338 = vector.broadcast %337 : vector<1x2xf32> to vector<2x2xf32>
    %339 = arith.addf %336, %338 : vector<2x2xf32>
    %c0_152 = arith.constant 0 : index
    %c0_153 = arith.constant 0 : index
    %340 = vector.load %arg23[%c0_152, %c0_153] : memref<2x2xf32, #tpu.memory_space<vmem>>, vector<2x2xf32>
    tpu.vector_store %arg23[%c0_152, %c0_153], %339 {strides = array<i32>} : memref<2x2xf32, #tpu.memory_space<vmem>>, vector<2x2xf32>,
    %cst_154 = arith.constant dense<0xFF800000> : vector<2xf32>
    %341 = vector.multi_reduction <maximumf>, %339, %cst_154 [1] : vector<2x2xf32> to vector<2xf32>
    %342 = vector.shape_cast %341 : vector<2xf32> to vector<2x1xf32>
    %343 = vector.broadcast %342 : vector<2x1xf32> to vector<2x2xf32>
    %344 = arith.subf %339, %343 : vector<2x2xf32>
    %345 = math.exp %344 : vector<2x2xf32>
    %cst_155 = arith.constant dense<0.000000e+00> : vector<2xf32>
    %346 = vector.multi_reduction <add>, %345, %cst_155 [1] : vector<2x2xf32> to vector<2xf32>
    %347 = vector.shape_cast %346 : vector<2xf32> to vector<2x1xf32>
    %348 = math.log %347 : vector<2x1xf32>
    %349 = arith.addf %342, %348 : vector<2x1xf32>
    %350 = vector.broadcast %349 : vector<2x1xf32> to vector<2x2xf32>
    %351 = arith.subf %339, %350 : vector<2x2xf32>
    %352 = tpu.iota {dimensions = array<i32: 1>} : vector<2x2xi32>
    %353 = tpu.iota {dimensions = array<i32: 0>} : vector<2x2xi32>
    %c0_i32 = arith.constant 0 : i32
    %354 = vector.broadcast %c0_i32 : i32 to vector<2x2xi32>
    %c0_i32_156 = arith.constant 0 : i32
    %355 = vector.broadcast %c0_i32_156 : i32 to vector<2x2xi32>
    %356 = arith.cmpi eq, %353, %355 : vector<2x2xi32>
    %c0_157 = arith.constant 0 : index
    %357 = memref.load %arg22[%c0_157] : memref<2xi32, #tpu.memory_space<smem>>
    %358 = vector.broadcast %357 : i32 to vector<2x2xi32>
    %359 = arith.select %356, %358, %354 : vector<2x2xi1>, vector<2x2xi32>
    %c1_i32 = arith.constant 1 : i32
    %360 = vector.broadcast %c1_i32 : i32 to vector<2x2xi32>
    %361 = arith.cmpi eq, %353, %360 : vector<2x2xi32>
    %c1_158 = arith.constant 1 : index
    %362 = memref.load %arg22[%c1_158] : memref<2xi32, #tpu.memory_space<smem>>
    %363 = vector.broadcast %362 : i32 to vector<2x2xi32>
    %364 = arith.select %361, %363, %359 : vector<2x2xi1>, vector<2x2xi32>
    %365 = arith.cmpi eq, %352, %364 : vector<2x2xi32>
    %366 = arith.extui %365 : vector<2x2xi1> to vector<2x2xi32>
    %367 = arith.sitofp %366 : vector<2x2xi32> to vector<2x2xf32>
    %368 = arith.mulf %367, %351 : vector<2x2xf32>
    %cst_159 = arith.constant dense<0.000000e+00> : vector<2xf32>
    %369 = vector.multi_reduction <add>, %368, %cst_159 [1] : vector<2x2xf32> to vector<2xf32>
    %370 = vector.shape_cast %369 : vector<2xf32> to vector<2x1xf32>
    %cst_160 = arith.constant 0.000000e+00 : f32
    %371 = vector.broadcast %cst_160 : f32 to vector<2x1xf32>
    %372 = arith.subf %371, %370 : vector<2x1xf32>
    %cst_161 = arith.constant dense<0.000000e+00> : vector<1xf32>
    %373 = vector.multi_reduction <add>, %372, %cst_161 [0] : vector<2x1xf32> to vector<1xf32>
    %374 = vector.shape_cast %373 : vector<1xf32> to vector<1x1xf32>
    %cst_162 = arith.constant 5.000000e-01 : f32
    %375 = vector.broadcast %cst_162 : f32 to vector<1x1xf32>
    %376 = arith.mulf %374, %375 : vector<1x1xf32>
    %c0_163 = arith.constant 0 : index
    %c0_164 = arith.constant 0 : index
    %377 = vector.load %arg24[%c0_163, %c0_164] : memref<1x1xf32, #tpu.memory_space<vmem>>, vector<1x1xf32>
    tpu.vector_store %arg24[%c0_163, %c0_164], %376 {strides = array<i32>} : memref<1x1xf32, #tpu.memory_space<vmem>>, vector<1x1xf32>,
    return
  }
}

</mosaic_0001>

<llo_original>
// kernel: bert_forward.1
$region0: #{bert_forward.1}
  #allocation0 [shape = 'u32[]', space=smem, size = 0x4, offset = 0x4, fixed_abs, tag = 'smem constant byte address 0x4 - core index']
  #allocation1 [shape = 'u32[144,128]{1,0:T(1,128)}', space=vmem, size = 0x12000, scoped, tag = 'internal scratch']
  %s0 = inlined_call_operand.vmem [shape: s32[16,1], index: 0, kind: input, shape index: {}]
  %s1 = inlined_call_operand.vmem [shape: f32[100,32], index: 1, kind: input, shape index: {}]
  %s2 = inlined_call_operand.vmem [shape: f32[16,32], index: 2, kind: input, shape index: {}]
  %s3 = inlined_call_operand.vmem [shape: f32[2,32], index: 3, kind: input, shape index: {}]
  %s4 = inlined_call_operand.vmem [shape: f32[1,32], index: 4, kind: input, shape index: {}]
  %s5 = inlined_call_operand.vmem [shape: f32[1,32], index: 5, kind: input, shape index: {}]
  %s6 = inlined_call_operand.vmem [shape: bf16[2,32,96], index: 6, kind: input, shape index: {}]
  %s7 = inlined_call_operand.vmem [shape: f32[2,1,96], index: 7, kind: input, shape index: {}]
  %s8 = inlined_call_operand.vmem [shape: bf16[2,32,32], index: 8, kind: input, shape index: {}]
  %s9 = inlined_call_operand.vmem [shape: f32[2,1,32], index: 9, kind: input, shape index: {}]
  %s10 = inlined_call_operand.vmem [shape: f32[2,1,32], index: 10, kind: input, shape index: {}]
  %s11 = inlined_call_operand.vmem [shape: f32[2,1,32], index: 11, kind: input, shape index: {}]
  %s12 = inlined_call_operand.vmem [shape: bf16[2,32,64], index: 12, kind: input, shape index: {}]
  %s13 = inlined_call_operand.vmem [shape: f32[2,1,64], index: 13, kind: input, shape index: {}]
  %s14 = inlined_call_operand.vmem [shape: bf16[2,64,32], index: 14, kind: input, shape index: {}]
  %s15 = inlined_call_operand.vmem [shape: f32[2,1,32], index: 15, kind: input, shape index: {}]
  %s16 = inlined_call_operand.vmem [shape: f32[2,1,32], index: 16, kind: input, shape index: {}]
  %s17 = inlined_call_operand.vmem [shape: f32[2,1,32], index: 17, kind: input, shape index: {}]
  %s18 = inlined_call_operand.vmem [shape: bf16[32,32], index: 18, kind: input, shape index: {}]
  %s19 = inlined_call_operand.vmem [shape: f32[1,32], index: 19, kind: input, shape index: {}]
  %s20 = inlined_call_operand.vmem [shape: bf16[32,2], index: 20, kind: input, shape index: {}]
  %s21 = inlined_call_operand.vmem [shape: f32[1,2], index: 21, kind: input, shape index: {}]
  %s22 = inlined_call_operand.vmem [shape: s32[2], index: 22, kind: input, shape index: {}]
  %s23 = inlined_call_operand.hbm [shape: f32[2,2], index: 23, kind: output, shape index: {0}]
  %s24 = inlined_call_operand.hbm [shape: f32[1,1], index: 24, kind: output, shape index: {1}]
  %25 = xla_tuple %s23, %s24
  %s26 = sld [smem:[#allocation0]]
  $region114: #{bert_forward.1} parent=0
    _
  %s28 = ssub.s32 1, %s26
  %s29 = scalar_select 0, %s28, %s26
  $region1: #{bert_forward.1} parent=0
    #allocation2 [shape = 'u8[512]{0}', space=smem, size = 0x200, scoped, tag = 'input window, operand 22, single buffered']
    #allocation3 [shape = 's32[1]{0}', space=sflag, size = 0x4, scoped, tag = 'scoped memory for bert_forward.1']
    #allocation4 [shape = 's32[1]{0}', space=sflag, size = 0x4, scoped, tag = 'scoped memory for bert_forward.1']
    #allocation5 [shape = 'u8[1024]{0}', space=vmem, size = 0x400, scoped, tag = 'output window, operand 0, single buffered']
    #allocation6 [shape = 'u8[512]{0}', space=vmem, size = 0x400, scoped, tag = 'output window, operand 1, single buffered']
    #allocation7 [shape = 's32[1]{0}', space=sflag, size = 0x4, scoped, tag = 'scoped memory for bert_forward.1']
    %30 = vsyncpa [#allocation4], 0
    %31 = vsyncpa [#allocation3], 0
    %32 = vsyncpa [#allocation7], 0
    // Predicated region
    $region2: #{bert_forward.1} parent=1 // pred_check
      _
    $region3: #{bert_forward.1} parent=1 // pred_check_branch
      %34 = sbr.rel (0) target = $region5
    $region4: #{bert_forward.1} parent=1 // pred_region
      _
    $region5: #{bert_forward.1} parent=1 // pred_fallthru
      _
    // Predicated region
    $region6: #{bert_forward.1} parent=1 // pred_check
      _
    $region7: #{bert_forward.1} parent=1 // pred_check_branch
      %36 = sbr.rel (0) target = $region9
    $region8: #{bert_forward.1} parent=1 // pred_region
      _
    $region9: #{bert_forward.1} parent=1 // pred_fallthru
      _
    // Predicated region
    $region10: #{bert_forward.1} parent=1 // pred_check
      _
    $region11: #{bert_forward.1} parent=1 // pred_check_branch
      %38 = sbr.rel (0) target = $region13
    $region12: #{bert_forward.1} parent=1 // pred_region
      _
    $region13: #{bert_forward.1} parent=1 // pred_fallthru
      _
    // Predicated region
    $region14: #{bert_forward.1} parent=1 // pred_check
      _
    $region15: #{bert_forward.1} parent=1 // pred_check_branch
      %40 = sbr.rel (0) target = $region17
    $region16: #{bert_forward.1} parent=1 // pred_region
      _
    $region17: #{bert_forward.1} parent=1 // pred_fallthru
      _
    // Predicated region
    $region18: #{bert_forward.1} parent=1 // pred_check
      _
    $region19: #{bert_forward.1} parent=1 // pred_check_branch
      %42 = sbr.rel (0) target = $region21
    $region20: #{bert_forward.1} parent=1 // pred_region
      _
    $region21: #{bert_forward.1} parent=1 // pred_fallthru
      _
    // Predicated region
    $region22: #{bert_forward.1} parent=1 // pred_check
      _
    $region23: #{bert_forward.1} parent=1 // pred_check_branch
      %44 = sbr.rel (0) target = $region25
    $region24: #{bert_forward.1} parent=1 // pred_region
      _
    $region25: #{bert_forward.1} parent=1 // pred_fallthru
      _
    // Predicated region
    $region26: #{bert_forward.1} parent=1 // pred_check
      _
    $region27: #{bert_forward.1} parent=1 // pred_check_branch
      %46 = sbr.rel (0) target = $region29
    $region28: #{bert_forward.1} parent=1 // pred_region
      _
    $region29: #{bert_forward.1} parent=1 // pred_fallthru
      _
    // Predicated region
    $region30: #{bert_forward.1} parent=1 // pred_check
      _
    $region31: #{bert_forward.1} parent=1 // pred_check_branch
      %48 = sbr.rel (0) target = $region33
    $region32: #{bert_forward.1} parent=1 // pred_region
      _
    $region33: #{bert_forward.1} parent=1 // pred_fallthru
      _
    // Predicated region
    $region34: #{bert_forward.1} parent=1 // pred_check
      _
    $region35: #{bert_forward.1} parent=1 // pred_check_branch
      %50 = sbr.rel (0) target = $region37
    $region36: #{bert_forward.1} parent=1 // pred_region
      _
    $region37: #{bert_forward.1} parent=1 // pred_fallthru
      _
    // Predicated region
    $region38: #{bert_forward.1} parent=1 // pred_check
      _
    $region39: #{bert_forward.1} parent=1 // pred_check_branch
      %52 = sbr.rel (0) target = $region41
    $region40: #{bert_forward.1} parent=1 // pred_region
      _
    $region41: #{bert_forward.1} parent=1 // pred_fallthru
      _
    // Predicated region
    $region42: #{bert_forward.1} parent=1 // pred_check
      _
    $region43: #{bert_forward.1} parent=1 // pred_check_branch
      %54 = sbr.rel (0) target = $region45
    $region44: #{bert_forward.1} parent=1 // pred_region
      _
    $region45: #{bert_forward.1} parent=1 // pred_fallthru
      _
    // Predicated region
    $region46: #{bert_forward.1} parent=1 // pred_check
      _
    $region47: #{bert_forward.1} parent=1 // pred_check_branch
      %56 = sbr.rel (0) target = $region49
    $region48: #{bert_forward.1} parent=1 // pred_region
      _
    $region49: #{bert_forward.1} parent=1 // pred_fallthru
      _
    // Predicated region
    $region50: #{bert_forward.1} parent=1 // pred_check
      _
    $region51: #{bert_forward.1} parent=1 // pred_check_branch
      %58 = sbr.rel (0) target = $region53
    $region52: #{bert_forward.1} parent=1 // pred_region
      _
    $region53: #{bert_forward.1} parent=1 // pred_fallthru
      _
    // Predicated region
    $region54: #{bert_forward.1} parent=1 // pred_check
      _
    $region55: #{bert_forward.1} parent=1 // pred_check_branch
      %60 = sbr.rel (0) target = $region57
    $region56: #{bert_forward.1} parent=1 // pred_region
      _
    $region57: #{bert_forward.1} parent=1 // pred_fallthru
      _
    // Predicated region
    $region58: #{bert_forward.1} parent=1 // pred_check
      _
    $region59: #{bert_forward.1} parent=1 // pred_check_branch
      %62 = sbr.rel (0) target = $region61
    $region60: #{bert_forward.1} parent=1 // pred_region
      _
    $region61: #{bert_forward.1} parent=1 // pred_fallthru
      _
    // Predicated region
    $region62: #{bert_forward.1} parent=1 // pred_check
      _
    $region63: #{bert_forward.1} parent=1 // pred_check_branch
      %64 = sbr.rel (0) target = $region65
    $region64: #{bert_forward.1} parent=1 // pred_region
      _
    $region65: #{bert_forward.1} parent=1 // pred_fallthru
      _
    // Predicated region
    $region66: #{bert_forward.1} parent=1 // pred_check
      _
    $region67: #{bert_forward.1} parent=1 // pred_check_branch
      %66 = sbr.rel (0) target = $region69
    $region68: #{bert_forward.1} parent=1 // pred_region
      _
    $region69: #{bert_forward.1} parent=1 // pred_fallthru
      _
    // Predicated region
    $region70: #{bert_forward.1} parent=1 // pred_check
      _
    $region71: #{bert_forward.1} parent=1 // pred_check_branch
      %68 = sbr.rel (0) target = $region73
    $region72: #{bert_forward.1} parent=1 // pred_region
      _
    $region73: #{bert_forward.1} parent=1 // pred_fallthru
      _
    // Predicated region
    $region74: #{bert_forward.1} parent=1 // pred_check
      _
    $region75: #{bert_forward.1} parent=1 // pred_check_branch
      %70 = sbr.rel (0) target = $region77
    $region76: #{bert_forward.1} parent=1 // pred_region
      _
    $region77: #{bert_forward.1} parent=1 // pred_fallthru
      _
    // Predicated region
    $region78: #{bert_forward.1} parent=1 // pred_check
      _
    $region79: #{bert_forward.1} parent=1 // pred_check_branch
      %72 = sbr.rel (0) target = $region81
    $region80: #{bert_forward.1} parent=1 // pred_region
      _
    $region81: #{bert_forward.1} parent=1 // pred_fallthru
      _
    // Predicated region
    $region82: #{bert_forward.1} parent=1 // pred_check
      _
    $region83: #{bert_forward.1} parent=1 // pred_check_branch
      %74 = sbr.rel (0) target = $region85
    $region84: #{bert_forward.1} parent=1 // pred_region
      _
    $region85: #{bert_forward.1} parent=1 // pred_fallthru
      _
    // Predicated region
    $region86: #{bert_forward.1} parent=1 // pred_check
      _
    $region87: #{bert_forward.1} parent=1 // pred_check_branch
      %76 = sbr.rel (0) target = $region89
    $region88: #{bert_forward.1} parent=1 // pred_region
      _
    $region89: #{bert_forward.1} parent=1 // pred_fallthru
      _
    // Predicated region
    $region90: #{bert_forward.1} parent=1 // pred_check
      _
    $region91: #{bert_forward.1} parent=1 // pred_check_branch
      %78 = sbr.rel (0) target = $region93
    $region92: #{bert_forward.1} parent=1 // pred_region
      %s80 = ssub.s32 16, 16
      %81 = vsyncadd [#allocation4], %s80
      %s83 = sshll.u32 %s22, 4
      %s84 = int_to_ptr.vmem [resolvable:$true] %s83
      %86 = dma.vmem_to_smem %s84, 16, [#allocation2], [#allocation4]
    $region93: #{bert_forward.1} parent=1 // pred_fallthru
      _
    // Predicated region
    $region94: #{bert_forward.1} parent=1 // pred_check
      _
    $region95: #{bert_forward.1} parent=1 // pred_check_branch
      %88 = sbr.rel (0) target = $region97
    $region96: #{bert_forward.1} parent=1 // pred_region
      %89 = dma.done [#allocation4], 16
    $region97: #{bert_forward.1} parent=1 // pred_fallthru
      _
    %90 = sfence
    %v92 = vlaneseq
    %v93 = vand.u32 %v92, 127
    %v94 = vld [vmem:[%s0] sm:$0xff]
    %v95 = vld [vmem:[%s0 + $0x8] sm:$0xff]
    %96 = vset.pattern.permute.xlu0 0
    %97 = vperm.xlu0 %96, %v94
    %v98 = vpop.permute.xlu0 %97
    %99 = vset.pattern.permute.xlu0 0
    %100 = vperm.xlu0 %99, %v95
    %v101 = vpop.permute.xlu0 %100
    %vm102 = vcmp.eq.s32.totalorder %v93, %v98
    %vm103 = vcmp.eq.s32.totalorder %v93, %v101
    %v104 = vsel %vm102, 1, 0
    %v105 = vsel %vm103, 1, 0
    %v106 = vcvt.s32.f32 %v104
    %v107 = vcvt.s32.f32 %v105
    %v108 = vld [vmem:[%s1] sm:$0xff]
    %v109 = vld [vmem:[%s1 + $0x8] sm:$0xff]
    %v110 = vld [vmem:[%s1 + $0x10] sm:$0xff]
    %v111 = vld [vmem:[%s1 + $0x18] sm:$0xff]
    %v112 = vld [vmem:[%s1 + $0x20] sm:$0xff]
    %v113 = vld [vmem:[%s1 + $0x28] sm:$0xff]
    %v114 = vld [vmem:[%s1 + $0x30] sm:$0xff]
    %v115 = vld [vmem:[%s1 + $0x38] sm:$0xff]
    %v116 = vld [vmem:[%s1 + $0x40] sm:$0xff]
    %v117 = vld [vmem:[%s1 + $0x48] sm:$0xff]
    %v118 = vld [vmem:[%s1 + $0x50] sm:$0xff]
    %v119 = vld [vmem:[%s1 + $0x58] sm:$0xff]
    %v120 = vld [vmem:[%s1 + $0x60] sm:$0xf]
    %v121 = vld [vmem:[%s2] sm:$0xff]
    %vm122 = vcmask 818176
    %v124 = vsel %vm122, %v106, 0
    %v127 = vsel %vm122, %v107, 0
    %vm129 = vcmask 1043456
    %v131 = vsel %vm129, %v120, 0
    %133 = vmatprep.subr.mxu0 0.0
    %134 = vmatpush1.msra.mxu0 %v108
    %135 = vmatprep.subr.mxu0 0.0
    %136 = vmatpush1.msra.mxu0 %v109
    %137 = vmatprep.subr.mxu0 0.0
    %138 = vmatpush1.msra.mxu0 %v110
    %139 = vmatprep.subr.mxu0 0.0
    %140 = vmatpush1.msra.mxu0 %v111
    %141 = vmatprep.subr.mxu0 0.0
    %142 = vmatpush1.msra.mxu0 %v112
    %143 = vmatprep.subr.mxu0 0.0
    %144 = vmatpush1.msra.mxu0 %v113
    %145 = vmatprep.subr.mxu0 0.0
    %146 = vmatpush1.msra.mxu0 %v114
    %147 = vmatprep.subr.mxu0 0.0
    %148 = vmatpush1.msra.mxu0 %v115
    %149 = vmatprep.subr.mxu0 0.0
    %150 = vmatpush1.msra.mxu0 %v116
    %151 = vmatprep.subr.mxu0 0.0
    %152 = vmatpush1.msra.mxu0 %v117
    %153 = vmatprep.subr.mxu0 0.0
    %154 = vmatpush1.msra.mxu0 %v118
    %155 = vmatprep.subr.mxu0 0.0
    %156 = vmatpush1.msra.mxu0 %v119
    %157 = vmatprep.subr.mxu0 0.0
    %158 = vmatpush1.msra.mxu0 %v131
    %159 = vmatprep.subr.mxu0 0.0
    %160 = vmatpush1.msra.mxu0 0.0
    %161 = vmatprep.subr.mxu0 0.0
    %162 = vmatpush1.msra.mxu0 0.0
    %163 = vmatprep.subr.mxu0 0.0
    %164 = vmatpush1.msra.mxu0 0.0
    %165 = vmatprep.subr.mxu0 0.0
    %166 = vmatpush1.msra.mxu0 0.0
    %167 = vmatprep.subr.mxu0 0.0
    %168 = vmatpush1.msra.mxu0 0.0
    %169 = vmatprep.subr.mxu0 0.0
    %170 = vmatpush1.msra.mxu0 0.0
    %171 = vmatprep.subr.mxu0 0.0
    %172 = vmatpush1.msra.mxu0 0.0
    %173 = vmatprep.subr.mxu0 0.0
    %174 = vmatpush1.msra.mxu0 0.0
    %175 = vmatprep.subr.mxu0 0.0
    %176 = vmatpush1.msra.mxu0 0.0
    %177 = vmatprep.subr.mxu0 0.0
    %178 = vmatpush1.msra.mxu0 0.0
    %179 = vmatprep.subr.mxu0 0.0
    %180 = vmatpush1.msra.mxu0 0.0
    %181 = vmatprep.subr.mxu0 0.0
    %182 = vmatpush1.msra.mxu0 0.0
    %183 = vmatprep.subr.mxu0 0.0
    %184 = vmatpush1.msra.mxu0 0.0
    %185 = vmatprep.subr.mxu0 0.0
    %186 = vmatpush1.msra.mxu0 0.0
    %187 = vmatprep.subr.mxu0 0.0
    %188 = vmatpush1.msra.mxu0 0.0
    %189 = vmatprep.subr.mxu0 0.0
    %190 = vmatpush1.msra.mxu0 0.0
    %191 = vmatprep.subr.mxu0 0.0
    %192 = vmatpush1.msra.mxu0 0.0
    %193 = vmatprep.subr.mxu0 0.0
    %194 = vmatpush1.msra.mxu0 0.0
    %195 = vmatprep.subr.mxu0 0.0
    %196 = vmatpush1.msra.mxu0 0.0
    %197 = vmatprep.mubr.f32.mxu0 0.0
    %198 = vmatmul.mubr.f32.gmra.mrb[0].mxu0 %v124
    %v199 = vpop.f32.mrb[0].mxu0
    %v200 = vadd.f32 %v121, %v199
    %v201 = vpop.f32.mrb[0].mxu0
    %202 = vmatprep.mubr.f32.mxu0 0.0
    %203 = vmatmul.mubr.f32.gmra.mrb[0].mxu0 %v127
    %v204 = vpop.f32.mrb[0].mxu0
    %v205 = vadd.f32 %v121, %v204
    %v206 = vpop.f32.mrb[0].mxu0
    %207 = vdwg.mxu0
    %v208 = vld [vmem:[%s3] sm:$0x1]
    %v209 = vlaneseq
    %v210 = vshrl.u32 %v209, 7
    %v211 = vsub.s32 0, %v210
    %v212 = vrot.slane %v208, %v211
    %v213 = vadd.f32 %v200, %v212
    %v214 = vadd.f32 %v205, %v212
    %v215 = vld [vmem:[%s4] sm:$0x1]
    %v216 = vld [vmem:[%s5] sm:$0x1]
    %vm217 = vcmask 261120
    %v218 = vsel %vm217, %v213, 0.0
    %219 = vadd.xlane.f32.xlu0 %v218
    %v220 = vpop.xlane.xlu0 %219
    %v221 = vsel %vm217, %v214, 0.0
    %222 = vadd.xlane.f32.xlu0 %v221
    %v223 = vpop.xlane.xlu0 %222
    %v224 = vrcp.pop 32.0
    %v225 = vmul.f32 %v220, %v224
    %v226 = vmul.f32 %v223, %v224
    %v227 = vsub.f32 %v213, %v225
    %v228 = vsub.f32 %v214, %v226
    %v229 = vmul.f32 %v227, %v227
    %v230 = vmul.f32 %v228, %v228
    %v231 = vsel %vm217, %v229, 0.0
    %232 = vadd.xlane.f32.xlu0 %v231
    %v233 = vpop.xlane.xlu0 %232
    %v234 = vsel %vm217, %v230, 0.0
    %235 = vadd.xlane.f32.xlu0 %v234
    %v236 = vpop.xlane.xlu0 %235
    %v237 = vmul.f32 %v233, %v224
    %v238 = vmul.f32 %v236, %v224
    %v239 = vadd.f32 %v237, 1e-12
    %v240 = vadd.f32 %v238, 1e-12
    %v241 = vrsqrt.pop %v239
    %v242 = vrsqrt.pop %v240
    %v243 = vmul.f32 %v227, %v241
    %v244 = vmul.f32 %v228, %v242
    %v246 = vlaneseq
    %v247 = vshrl.u32 %v246, 7
    %v248 = vsub.s32 0, %v247
    %v249 = vrot.slane %v215, %v248
    %v251 = vmul.f32 %v243, %v249
    %v252 = vmul.f32 %v244, %v249
    %v254 = vlaneseq
    %v255 = vshrl.u32 %v254, 7
    %v256 = vsub.s32 0, %v255
    %v257 = vrot.slane %v216, %v256
    %v259 = vadd.f32 %v251, %v257
    %v260 = vadd.f32 %v252, %v257
    %v261 = vlaneseq
    %v262 = vshrl.u32 %v261, 7
    %v263 = vadd.s32 %v262, 8
    %v264 = vshra.s32 %v262, 3
    %v265 = vshra.s32 %v263, 3
    %v266 = vshra.s32 %v93, 3
    %vm267 = vcmp.eq.s32.totalorder %v264, %v266
    %vm268 = vcmp.eq.s32.totalorder %v265, %v266
    %v269 = vsel %vm267, 0.0, -1e+30
    %v270 = vsel %vm268, 0.0, -1e+30
    %v271 = vpack.c.bf16 %v260, %v259
    %v272 = vld [vmem:[%s6] sm:$0xf]
    %v273 = vld [vmem:[%s6 + $0x4] sm:$0xf]
    %v274 = vld [vmem:[%s6 + $0x8] sm:$0xf]
    %v275 = vld [vmem:[%s6 + $0xc] sm:$0xf]
    %v276 = vld [vmem:[%s7] sm:$0x1]
    %v278 = vlaneseq
    %v279 = vshrl.u32 %v278, 7
    %v280 = vsub.s32 0, %v279
    %v281 = vrot.slane %v276, %v280
    %v287 = vunpack.c.l.b16 %v272
    %v288 = vunpack.c.l.b16 %v273
    %v289 = vunpack.c.l.b16 %v274
    %v290 = vunpack.c.l.b16 %v275
    %v291 = vpack.c.b16 %v288, %v287
    %v292 = vpack.c.b16 %v290, %v289
    %v296 = vsel %vm217, %v271, 0
    %298 = vmatprep.subr.bf16.mxu0 0
    %299 = vmatpush1.bf16.msra.mxu0 %v291
    %300 = vmatprep.subr.bf16.mxu0 0
    %301 = vmatpush1.bf16.msra.mxu0 %v292
    %302 = vmatprep.subr.bf16.mxu0 0
    %303 = vmatpush1.bf16.msra.mxu0 0
    %304 = vmatprep.subr.bf16.mxu0 0
    %305 = vmatpush1.bf16.msra.mxu0 0
    %306 = vmatprep.subr.bf16.mxu0 0
    %307 = vmatpush1.bf16.msra.mxu0 0
    %308 = vmatprep.subr.bf16.mxu0 0
    %309 = vmatpush1.bf16.msra.mxu0 0
    %310 = vmatprep.subr.bf16.mxu0 0
    %311 = vmatpush1.bf16.msra.mxu0 0
    %312 = vmatprep.subr.bf16.mxu0 0
    %313 = vmatpush1.bf16.msra.mxu0 0
    %314 = vmatprep.subr.bf16.mxu0 0
    %315 = vmatpush1.bf16.msra.mxu0 0
    %316 = vmatprep.subr.bf16.mxu0 0
    %317 = vmatpush1.bf16.msra.mxu0 0
    %318 = vmatprep.subr.bf16.mxu0 0
    %319 = vmatpush1.bf16.msra.mxu0 0
    %320 = vmatprep.subr.bf16.mxu0 0
    %321 = vmatpush1.bf16.msra.mxu0 0
    %322 = vmatprep.subr.bf16.mxu0 0
    %323 = vmatpush1.bf16.msra.mxu0 0
    %324 = vmatprep.subr.bf16.mxu0 0
    %325 = vmatpush1.bf16.msra.mxu0 0
    %326 = vmatprep.subr.bf16.mxu0 0
    %327 = vmatpush1.bf16.msra.mxu0 0
    %328 = vmatprep.subr.bf16.mxu0 0
    %329 = vmatpush1.bf16.msra.mxu0 0
    %330 = vmatprep.mubr.bf16.mxu0 0
    %331 = vmatmul.mubr.bf16.gmra.mrb[0].mxu0 %v296
    %v332 = vpop.f32.mrb[0].mxu0
    %v333 = vadd.f32 %v281, %v332
    %v334 = vpop.f32.mrb[0].mxu0
    %v335 = vpop.f32.mrb[0].mxu0
    %v336 = vadd.f32 %v281, %v335
    %v337 = vpop.f32.mrb[0].mxu0
    %338 = vdwg.mxu0
    %v339 = vpack.c.bf16 %v336, %v333
    %341 = vrot.lane.b32.xlu0 %v339, 96
    %v342 = vpop.permute.xlu0 %341
    %vm343 = vcmask 130048
    %v345 = vsel %vm343, %v339, 0
    %v348 = vsel %vm343, %v342, 0
    %350 = vmatprep.subr.bf16.mxu0 0
    %351 = vmatpush1.bf16.xpose.msra.mxu0 %v348
    %352 = vmatprep.subr.bf16.mxu0 0
    %353 = vmatpush1.bf16.xpose.msra.mxu0 0
    %354 = vmatprep.subr.bf16.mxu0 0
    %355 = vmatpush1.bf16.xpose.msra.mxu0 0
    %356 = vmatprep.subr.bf16.mxu0 0
    %357 = vmatpush1.bf16.xpose.msra.mxu0 0
    %358 = vmatprep.subr.bf16.mxu0 0
    %359 = vmatpush1.bf16.xpose.msra.mxu0 0
    %360 = vmatprep.subr.bf16.mxu0 0
    %361 = vmatpush1.bf16.xpose.msra.mxu0 0
    %362 = vmatprep.subr.bf16.mxu0 0
    %363 = vmatpush1.bf16.xpose.msra.mxu0 0
    %364 = vmatprep.subr.bf16.mxu0 0
    %365 = vmatpush1.bf16.xpose.msra.mxu0 0
    %366 = vmatprep.subr.bf16.mxu0 0
    %367 = vmatpush1.bf16.xpose.msra.mxu0 0
    %368 = vmatprep.subr.bf16.mxu0 0
    %369 = vmatpush1.bf16.xpose.msra.mxu0 0
    %370 = vmatprep.subr.bf16.mxu0 0
    %371 = vmatpush1.bf16.xpose.msra.mxu0 0
    %372 = vmatprep.subr.bf16.mxu0 0
    %373 = vmatpush1.bf16.xpose.msra.mxu0 0
    %374 = vmatprep.subr.bf16.mxu0 0
    %375 = vmatpush1.bf16.xpose.msra.mxu0 0
    %376 = vmatprep.subr.bf16.mxu0 0
    %377 = vmatpush1.bf16.xpose.msra.mxu0 0
    %378 = vmatprep.subr.bf16.mxu0 0
    %379 = vmatpush1.bf16.xpose.msra.mxu0 0
    %380 = vmatprep.subr.bf16.mxu0 0
    %381 = vmatpush1.bf16.xpose.msra.mxu0 0
    %382 = vmatprep.mubr.bf16.mxu0 0
    %383 = vmatmul.mubr.bf16.gmra.mrb[0].mxu0 %v345
    %v384 = vpop.f32.mrb[0].mxu0
    %v385 = vadd.f32 %v269, %v384
    %v386 = vpop.f32.mrb[0].mxu0
    %v387 = vpop.f32.mrb[0].mxu0
    %v388 = vadd.f32 %v270, %v387
    %v389 = vpop.f32.mrb[0].mxu0
    %390 = vdwg.mxu0
    %v391 = vsel %vm343, %v385, -inf
    %392 = vmax.xlane.f32.xlu0 %v391
    %v393 = vpop.xlane.xlu0 %392
    %v394 = vsel %vm343, %v388, -inf
    %395 = vmax.xlane.f32.xlu0 %v394
    %v396 = vpop.xlane.xlu0 %395
    %v397 = vsub.f32 %v385, %v393
    %v398 = vsub.f32 %v388, %v396
    %v399 = vmul.f32 %v397, 1.442695
    %v400 = vpow.pop %v399
    %v401 = vmul.f32 %v398, 1.442695
    %v402 = vpow.pop %v401
    %v403 = vsel %vm343, %v400, 0.0
    %404 = vadd.xlane.f32.xlu0 %v403
    %v405 = vpop.xlane.xlu0 %404
    %v406 = vsel %vm343, %v402, 0.0
    %407 = vadd.xlane.f32.xlu0 %v406
    %v408 = vpop.xlane.xlu0 %407
    %v409 = vrcp.pop %v405
    %v410 = vmul.f32 %v400, %v409
    %v411 = vrcp.pop %v408
    %v412 = vmul.f32 %v402, %v411
    %v413 = vpack.c.bf16 %v412, %v410
    %414 = vrot.lane.b32.xlu0 %v339, 64
    %v415 = vpop.permute.xlu0 %414
    %v418 = vsel %vm343, %v413, 0
    %420 = vmatprep.subr.bf16.mxu0 0
    %421 = vmatpush1.bf16.msra.mxu0 %v415
    %422 = vmatprep.subr.bf16.mxu0 0
    %423 = vmatpush1.bf16.msra.mxu0 0
    %424 = vmatprep.subr.bf16.mxu0 0
    %425 = vmatpush1.bf16.msra.mxu0 0
    %426 = vmatprep.subr.bf16.mxu0 0
    %427 = vmatpush1.bf16.msra.mxu0 0
    %428 = vmatprep.subr.bf16.mxu0 0
    %429 = vmatpush1.bf16.msra.mxu0 0
    %430 = vmatprep.subr.bf16.mxu0 0
    %431 = vmatpush1.bf16.msra.mxu0 0
    %432 = vmatprep.subr.bf16.mxu0 0
    %433 = vmatpush1.bf16.msra.mxu0 0
    %434 = vmatprep.subr.bf16.mxu0 0
    %435 = vmatpush1.bf16.msra.mxu0 0
    %436 = vmatprep.subr.bf16.mxu0 0
    %437 = vmatpush1.bf16.msra.mxu0 0
    %438 = vmatprep.subr.bf16.mxu0 0
    %439 = vmatpush1.bf16.msra.mxu0 0
    %440 = vmatprep.subr.bf16.mxu0 0
    %441 = vmatpush1.bf16.msra.mxu0 0
    %442 = vmatprep.subr.bf16.mxu0 0
    %443 = vmatpush1.bf16.msra.mxu0 0
    %444 = vmatprep.subr.bf16.mxu0 0
    %445 = vmatpush1.bf16.msra.mxu0 0
    %446 = vmatprep.subr.bf16.mxu0 0
    %447 = vmatpush1.bf16.msra.mxu0 0
    %448 = vmatprep.subr.bf16.mxu0 0
    %449 = vmatpush1.bf16.msra.mxu0 0
    %450 = vmatprep.subr.bf16.mxu0 0
    %451 = vmatpush1.bf16.msra.mxu0 0
    %452 = vmatprep.mubr.bf16.mxu0 0
    %453 = vmatmul.mubr.bf16.gmra.mrb[0].mxu0 %v418
    %v454 = vpop.f32.mrb[0].mxu0
    %v455 = vadd.f32 0.0, %v454
    %v456 = vpop.f32.mrb[0].mxu0
    %v457 = vpop.f32.mrb[0].mxu0
    %v458 = vadd.f32 0.0, %v457
    %v459 = vpop.f32.mrb[0].mxu0
    %460 = vdwg.mxu0
    %461 = vrot.lane.b32.xlu0 %v339, 112
    %v462 = vpop.permute.xlu0 %461
    %463 = vrot.lane.b32.xlu0 %v339, 80
    %v464 = vpop.permute.xlu0 %463
    %v466 = vsel %vm343, %v462, 0
    %v469 = vsel %vm343, %v464, 0
    %471 = vmatprep.subr.bf16.mxu0 0
    %472 = vmatpush1.bf16.xpose.msra.mxu0 %v469
    %473 = vmatprep.subr.bf16.mxu0 0
    %474 = vmatpush1.bf16.xpose.msra.mxu0 0
    %475 = vmatprep.subr.bf16.mxu0 0
    %476 = vmatpush1.bf16.xpose.msra.mxu0 0
    %477 = vmatprep.subr.bf16.mxu0 0
    %478 = vmatpush1.bf16.xpose.msra.mxu0 0
    %479 = vmatprep.subr.bf16.mxu0 0
    %480 = vmatpush1.bf16.xpose.msra.mxu0 0
    %481 = vmatprep.subr.bf16.mxu0 0
    %482 = vmatpush1.bf16.xpose.msra.mxu0 0
    %483 = vmatprep.subr.bf16.mxu0 0
    %484 = vmatpush1.bf16.xpose.msra.mxu0 0
    %485 = vmatprep.subr.bf16.mxu0 0
    %486 = vmatpush1.bf16.xpose.msra.mxu0 0
    %487 = vmatprep.subr.bf16.mxu0 0
    %488 = vmatpush1.bf16.xpose.msra.mxu0 0
    %489 = vmatprep.subr.bf16.mxu0 0
    %490 = vmatpush1.bf16.xpose.msra.mxu0 0
    %491 = vmatprep.subr.bf16.mxu0 0
    %492 = vmatpush1.bf16.xpose.msra.mxu0 0
    %493 = vmatprep.subr.bf16.mxu0 0
    %494 = vmatpush1.bf16.xpose.msra.mxu0 0
    %495 = vmatprep.subr.bf16.mxu0 0
    %496 = vmatpush1.bf16.xpose.msra.mxu0 0
    %497 = vmatprep.subr.bf16.mxu0 0
    %498 = vmatpush1.bf16.xpose.msra.mxu0 0
    %499 = vmatprep.subr.bf16.mxu0 0
    %500 = vmatpush1.bf16.xpose.msra.mxu0 0
    %501 = vmatprep.subr.bf16.mxu0 0
    %502 = vmatpush1.bf16.xpose.msra.mxu0 0
    %503 = vmatprep.mubr.bf16.mxu0 0
    %504 = vmatmul.mubr.bf16.gmra.mrb[0].mxu0 %v466
    %v505 = vpop.f32.mrb[0].mxu0
    %v506 = vadd.f32 %v269, %v505
    %v507 = vpop.f32.mrb[0].mxu0
    %v508 = vpop.f32.mrb[0].mxu0
    %v509 = vadd.f32 %v270, %v508
    %v510 = vpop.f32.mrb[0].mxu0
    %511 = vdwg.mxu0
    %v512 = vsel %vm343, %v506, -inf
    %513 = vmax.xlane.f32.xlu0 %v512
    %v514 = vpop.xlane.xlu0 %513
    %v515 = vsel %vm343, %v509, -inf
    %516 = vmax.xlane.f32.xlu0 %v515
    %v517 = vpop.xlane.xlu0 %516
    %v518 = vsub.f32 %v506, %v514
    %v519 = vsub.f32 %v509, %v517
    %v520 = vmul.f32 %v518, 1.442695
    %v521 = vpow.pop %v520
    %v522 = vmul.f32 %v519, 1.442695
    %v523 = vpow.pop %v522
    %v524 = vsel %vm343, %v521, 0.0
    %525 = vadd.xlane.f32.xlu0 %v524
    %v526 = vpop.xlane.xlu0 %525
    %v527 = vsel %vm343, %v523, 0.0
    %528 = vadd.xlane.f32.xlu0 %v527
    %v529 = vpop.xlane.xlu0 %528
    %v530 = vrcp.pop %v526
    %v531 = vmul.f32 %v521, %v530
    %v532 = vrcp.pop %v529
    %v533 = vmul.f32 %v523, %v532
    %v534 = vpack.c.bf16 %v533, %v531
    %535 = vrot.lane.b32.xlu0 %v339, 48
    %v536 = vpop.permute.xlu0 %535
    %v539 = vsel %vm343, %v534, 0
    %541 = vmatprep.subr.bf16.mxu0 0
    %542 = vmatpush1.bf16.msra.mxu0 %v536
    %543 = vmatprep.subr.bf16.mxu0 0
    %544 = vmatpush1.bf16.msra.mxu0 0
    %545 = vmatprep.subr.bf16.mxu0 0
    %546 = vmatpush1.bf16.msra.mxu0 0
    %547 = vmatprep.subr.bf16.mxu0 0
    %548 = vmatpush1.bf16.msra.mxu0 0
    %549 = vmatprep.subr.bf16.mxu0 0
    %550 = vmatpush1.bf16.msra.mxu0 0
    %551 = vmatprep.subr.bf16.mxu0 0
    %552 = vmatpush1.bf16.msra.mxu0 0
    %553 = vmatprep.subr.bf16.mxu0 0
    %554 = vmatpush1.bf16.msra.mxu0 0
    %555 = vmatprep.subr.bf16.mxu0 0
    %556 = vmatpush1.bf16.msra.mxu0 0
    %557 = vmatprep.subr.bf16.mxu0 0
    %558 = vmatpush1.bf16.msra.mxu0 0
    %559 = vmatprep.subr.bf16.mxu0 0
    %560 = vmatpush1.bf16.msra.mxu0 0
    %561 = vmatprep.subr.bf16.mxu0 0
    %562 = vmatpush1.bf16.msra.mxu0 0
    %563 = vmatprep.subr.bf16.mxu0 0
    %564 = vmatpush1.bf16.msra.mxu0 0
    %565 = vmatprep.subr.bf16.mxu0 0
    %566 = vmatpush1.bf16.msra.mxu0 0
    %567 = vmatprep.subr.bf16.mxu0 0
    %568 = vmatpush1.bf16.msra.mxu0 0
    %569 = vmatprep.subr.bf16.mxu0 0
    %570 = vmatpush1.bf16.msra.mxu0 0
    %571 = vmatprep.subr.bf16.mxu0 0
    %572 = vmatpush1.bf16.msra.mxu0 0
    %573 = vmatprep.mubr.bf16.mxu0 0
    %574 = vmatmul.mubr.bf16.gmra.mrb[0].mxu0 %v539
    %v575 = vpop.f32.mrb[0].mxu0
    %v576 = vadd.f32 0.0, %v575
    %v577 = vpop.f32.mrb[0].mxu0
    %v578 = vpop.f32.mrb[0].mxu0
    %v579 = vadd.f32 0.0, %v578
    %v580 = vpop.f32.mrb[0].mxu0
    %581 = vdwg.mxu0
    %584 = vrot.lane.b32.xlu0 %v576, 16
    %v585 = vpop.permute.xlu0 %584
    %586 = vrot.lane.b32.xlu0 %v579, 16
    %v587 = vpop.permute.xlu0 %586
    %v590 = vsel %vm343, %v455, %v585
    %v591 = vsel %vm343, %v458, %v587
    %v592 = vpack.c.bf16 %v591, %v590
    %v593 = vld [vmem:[%s8] sm:$0xf]
    %v594 = vld [vmem:[%s8 + $0x4] sm:$0xf]
    %v595 = vld [vmem:[%s8 + $0x8] sm:$0xf]
    %v596 = vld [vmem:[%s8 + $0xc] sm:$0xf]
    %v597 = vld [vmem:[%s9] sm:$0x1]
    %v599 = vlaneseq
    %v600 = vshrl.u32 %v599, 7
    %v601 = vsub.s32 0, %v600
    %v602 = vrot.slane %v597, %v601
    %v608 = vunpack.c.l.b16 %v593
    %v609 = vunpack.c.l.b16 %v594
    %v610 = vunpack.c.l.b16 %v595
    %v611 = vunpack.c.l.b16 %v596
    %v612 = vpack.c.b16 %v609, %v608
    %v613 = vpack.c.b16 %v611, %v610
    %v617 = vsel %vm217, %v592, 0
    %619 = vmatprep.subr.bf16.mxu0 0
    %620 = vmatpush1.bf16.msra.mxu0 %v612
    %621 = vmatprep.subr.bf16.mxu0 0
    %622 = vmatpush1.bf16.msra.mxu0 %v613
    %623 = vmatprep.subr.bf16.mxu0 0
    %624 = vmatpush1.bf16.msra.mxu0 0
    %625 = vmatprep.subr.bf16.mxu0 0
    %626 = vmatpush1.bf16.msra.mxu0 0
    %627 = vmatprep.subr.bf16.mxu0 0
    %628 = vmatpush1.bf16.msra.mxu0 0
    %629 = vmatprep.subr.bf16.mxu0 0
    %630 = vmatpush1.bf16.msra.mxu0 0
    %631 = vmatprep.subr.bf16.mxu0 0
    %632 = vmatpush1.bf16.msra.mxu0 0
    %633 = vmatprep.subr.bf16.mxu0 0
    %634 = vmatpush1.bf16.msra.mxu0 0
    %635 = vmatprep.subr.bf16.mxu0 0
    %636 = vmatpush1.bf16.msra.mxu0 0
    %637 = vmatprep.subr.bf16.mxu0 0
    %638 = vmatpush1.bf16.msra.mxu0 0
    %639 = vmatprep.subr.bf16.mxu0 0
    %640 = vmatpush1.bf16.msra.mxu0 0
    %641 = vmatprep.subr.bf16.mxu0 0
    %642 = vmatpush1.bf16.msra.mxu0 0
    %643 = vmatprep.subr.bf16.mxu0 0
    %644 = vmatpush1.bf16.msra.mxu0 0
    %645 = vmatprep.subr.bf16.mxu0 0
    %646 = vmatpush1.bf16.msra.mxu0 0
    %647 = vmatprep.subr.bf16.mxu0 0
    %648 = vmatpush1.bf16.msra.mxu0 0
    %649 = vmatprep.subr.bf16.mxu0 0
    %650 = vmatpush1.bf16.msra.mxu0 0
    %651 = vmatprep.mubr.bf16.mxu0 0
    %652 = vmatmul.mubr.bf16.gmra.mrb[0].mxu0 %v617
    %v653 = vpop.f32.mrb[0].mxu0
    %v654 = vadd.f32 %v602, %v653
    %v655 = vpop.f32.mrb[0].mxu0
    %v656 = vpop.f32.mrb[0].mxu0
    %v657 = vadd.f32 %v602, %v656
    %v658 = vpop.f32.mrb[0].mxu0
    %659 = vdwg.mxu0
    %v660 = vadd.f32 %v259, %v654
    %v661 = vadd.f32 %v260, %v657
    %v662 = vld [vmem:[%s10] sm:$0x1]
    %v663 = vld [vmem:[%s11] sm:$0x1]
    %v664 = vsel %vm217, %v660, 0.0
    %665 = vadd.xlane.f32.xlu0 %v664
    %v666 = vpop.xlane.xlu0 %665
    %v667 = vsel %vm217, %v661, 0.0
    %668 = vadd.xlane.f32.xlu0 %v667
    %v669 = vpop.xlane.xlu0 %668
    %v670 = vmul.f32 %v666, %v224
    %v671 = vmul.f32 %v669, %v224
    %v672 = vsub.f32 %v660, %v670
    %v673 = vsub.f32 %v661, %v671
    %v674 = vmul.f32 %v672, %v672
    %v675 = vmul.f32 %v673, %v673
    %v676 = vsel %vm217, %v674, 0.0
    %677 = vadd.xlane.f32.xlu0 %v676
    %v678 = vpop.xlane.xlu0 %677
    %v679 = vsel %vm217, %v675, 0.0
    %680 = vadd.xlane.f32.xlu0 %v679
    %v681 = vpop.xlane.xlu0 %680
    %v682 = vmul.f32 %v678, %v224
    %v683 = vmul.f32 %v681, %v224
    %v684 = vadd.f32 %v682, 1e-12
    %v685 = vadd.f32 %v683, 1e-12
    %v686 = vrsqrt.pop %v684
    %v687 = vrsqrt.pop %v685
    %v688 = vmul.f32 %v672, %v686
    %v689 = vmul.f32 %v673, %v687
    %v691 = vlaneseq
    %v692 = vshrl.u32 %v691, 7
    %v693 = vsub.s32 0, %v692
    %v694 = vrot.slane %v662, %v693
    %v696 = vmul.f32 %v688, %v694
    %v697 = vmul.f32 %v689, %v694
    %v699 = vlaneseq
    %v700 = vshrl.u32 %v699, 7
    %v701 = vsub.s32 0, %v700
    %v702 = vrot.slane %v663, %v701
    %v704 = vadd.f32 %v696, %v702
    %v705 = vadd.f32 %v697, %v702
    %v706 = vpack.c.bf16 %v705, %v704
    %v707 = vld [vmem:[%s12] sm:$0xf]
    %v708 = vld [vmem:[%s12 + $0x4] sm:$0xf]
    %v709 = vld [vmem:[%s12 + $0x8] sm:$0xf]
    %v710 = vld [vmem:[%s12 + $0xc] sm:$0xf]
    %v711 = vld [vmem:[%s13] sm:$0x1]
    %v713 = vlaneseq
    %v714 = vshrl.u32 %v713, 7
    %v715 = vsub.s32 0, %v714
    %v716 = vrot.slane %v711, %v715
    %v722 = vunpack.c.l.b16 %v707
    %v723 = vunpack.c.l.b16 %v708
    %v724 = vunpack.c.l.b16 %v709
    %v725 = vunpack.c.l.b16 %v710
    %v726 = vpack.c.b16 %v723, %v722
    %v727 = vpack.c.b16 %v725, %v724
    %v731 = vsel %vm217, %v706, 0
    %733 = vmatprep.subr.bf16.mxu0 0
    %734 = vmatpush1.bf16.msra.mxu0 %v726
    %735 = vmatprep.subr.bf16.mxu0 0
    %736 = vmatpush1.bf16.msra.mxu0 %v727
    %737 = vmatprep.subr.bf16.mxu0 0
    %738 = vmatpush1.bf16.msra.mxu0 0
    %739 = vmatprep.subr.bf16.mxu0 0
    %740 = vmatpush1.bf16.msra.mxu0 0
    %741 = vmatprep.subr.bf16.mxu0 0
    %742 = vmatpush1.bf16.msra.mxu0 0
    %743 = vmatprep.subr.bf16.mxu0 0
    %744 = vmatpush1.bf16.msra.mxu0 0
    %745 = vmatprep.subr.bf16.mxu0 0
    %746 = vmatpush1.bf16.msra.mxu0 0
    %747 = vmatprep.subr.bf16.mxu0 0
    %748 = vmatpush1.bf16.msra.mxu0 0
    %749 = vmatprep.subr.bf16.mxu0 0
    %750 = vmatpush1.bf16.msra.mxu0 0
    %751 = vmatprep.subr.bf16.mxu0 0
    %752 = vmatpush1.bf16.msra.mxu0 0
    %753 = vmatprep.subr.bf16.mxu0 0
    %754 = vmatpush1.bf16.msra.mxu0 0
    %755 = vmatprep.subr.bf16.mxu0 0
    %756 = vmatpush1.bf16.msra.mxu0 0
    %757 = vmatprep.subr.bf16.mxu0 0
    %758 = vmatpush1.bf16.msra.mxu0 0
    %759 = vmatprep.subr.bf16.mxu0 0
    %760 = vmatpush1.bf16.msra.mxu0 0
    %761 = vmatprep.subr.bf16.mxu0 0
    %762 = vmatpush1.bf16.msra.mxu0 0
    %763 = vmatprep.subr.bf16.mxu0 0
    %764 = vmatpush1.bf16.msra.mxu0 0
    %765 = vmatprep.mubr.bf16.mxu0 0
    %766 = vmatmul.mubr.bf16.gmra.mrb[0].mxu0 %v731
    %v767 = vpop.f32.mrb[0].mxu0
    %v768 = vadd.f32 %v716, %v767
    %v769 = vpop.f32.mrb[0].mxu0
    %v770 = vpop.f32.mrb[0].mxu0
    %v771 = vadd.f32 %v716, %v770
    %v772 = vpop.f32.mrb[0].mxu0
    %773 = vdwg.mxu0
    %v774 = vmul.f32 %v768, 0.5
    %v775 = vmul.f32 %v771, 0.5
    %v776 = vmul.f32 %v768, 0.044715
    %v777 = vmul.f32 %v771, 0.044715
    %v778 = vmul.f32 %v776, %v768
    %v779 = vmul.f32 %v777, %v771
    %v780 = vmul.f32 %v778, %v768
    %v781 = vmul.f32 %v779, %v771
    %v782 = vadd.f32 %v768, %v780
    %v783 = vadd.f32 %v771, %v781
    %v784 = vmul.f32 %v782, 0.7978846
    %v785 = vmul.f32 %v783, 0.7978846
    %v786 = vtanh.pop %v784
    %v787 = vtanh.pop %v785
    %v788 = vadd.f32 %v786, 1.0
    %v789 = vadd.f32 %v787, 1.0
    %v790 = vmul.f32 %v774, %v788
    %v791 = vmul.f32 %v775, %v789
    %v792 = vpack.c.bf16 %v791, %v790
    %v793 = vld [vmem:[%s14] sm:$0xf]
    %v794 = vld [vmem:[%s14 + $0x4] sm:$0xf]
    %v795 = vld [vmem:[%s14 + $0x8] sm:$0xf]
    %v796 = vld [vmem:[%s14 + $0xc] sm:$0xf]
    %v797 = vld [vmem:[%s14 + $0x10] sm:$0xf]
    %v798 = vld [vmem:[%s14 + $0x14] sm:$0xf]
    %v799 = vld [vmem:[%s14 + $0x18] sm:$0xf]
    %v800 = vld [vmem:[%s14 + $0x1c] sm:$0xf]
    %v801 = vld [vmem:[%s15] sm:$0x1]
    %v803 = vlaneseq
    %v804 = vshrl.u32 %v803, 7
    %v805 = vsub.s32 0, %v804
    %v806 = vrot.slane %v801, %v805
    %v816 = vunpack.c.l.b16 %v793
    %v817 = vunpack.c.l.b16 %v794
    %v818 = vunpack.c.l.b16 %v795
    %v819 = vunpack.c.l.b16 %v796
    %v820 = vunpack.c.l.b16 %v797
    %v821 = vunpack.c.l.b16 %v798
    %v822 = vunpack.c.l.b16 %v799
    %v823 = vunpack.c.l.b16 %v800
    %v824 = vpack.c.b16 %v817, %v816
    %v825 = vpack.c.b16 %v819, %v818
    %v826 = vpack.c.b16 %v821, %v820
    %v827 = vpack.c.b16 %v823, %v822
    %vm832 = vcmask 523264
    %v834 = vsel %vm832, %v792, 0
    %836 = vmatprep.subr.bf16.mxu0 0
    %837 = vmatpush1.bf16.msra.mxu0 %v824
    %838 = vmatprep.subr.bf16.mxu0 0
    %839 = vmatpush1.bf16.msra.mxu0 %v825
    %840 = vmatprep.subr.bf16.mxu0 0
    %841 = vmatpush1.bf16.msra.mxu0 %v826
    %842 = vmatprep.subr.bf16.mxu0 0
    %843 = vmatpush1.bf16.msra.mxu0 %v827
    %844 = vmatprep.subr.bf16.mxu0 0
    %845 = vmatpush1.bf16.msra.mxu0 0
    %846 = vmatprep.subr.bf16.mxu0 0
    %847 = vmatpush1.bf16.msra.mxu0 0
    %848 = vmatprep.subr.bf16.mxu0 0
    %849 = vmatpush1.bf16.msra.mxu0 0
    %850 = vmatprep.subr.bf16.mxu0 0
    %851 = vmatpush1.bf16.msra.mxu0 0
    %852 = vmatprep.subr.bf16.mxu0 0
    %853 = vmatpush1.bf16.msra.mxu0 0
    %854 = vmatprep.subr.bf16.mxu0 0
    %855 = vmatpush1.bf16.msra.mxu0 0
    %856 = vmatprep.subr.bf16.mxu0 0
    %857 = vmatpush1.bf16.msra.mxu0 0
    %858 = vmatprep.subr.bf16.mxu0 0
    %859 = vmatpush1.bf16.msra.mxu0 0
    %860 = vmatprep.subr.bf16.mxu0 0
    %861 = vmatpush1.bf16.msra.mxu0 0
    %862 = vmatprep.subr.bf16.mxu0 0
    %863 = vmatpush1.bf16.msra.mxu0 0
    %864 = vmatprep.subr.bf16.mxu0 0
    %865 = vmatpush1.bf16.msra.mxu0 0
    %866 = vmatprep.subr.bf16.mxu0 0
    %867 = vmatpush1.bf16.msra.mxu0 0
    %868 = vmatprep.mubr.bf16.mxu0 0
    %869 = vmatmul.mubr.bf16.gmra.mrb[0].mxu0 %v834
    %v870 = vpop.f32.mrb[0].mxu0
    %v871 = vadd.f32 %v806, %v870
    %v872 = vpop.f32.mrb[0].mxu0
    %v873 = vpop.f32.mrb[0].mxu0
    %v874 = vadd.f32 %v806, %v873
    %v875 = vpop.f32.mrb[0].mxu0
    %876 = vdwg.mxu0
    %v877 = vadd.f32 %v704, %v871
    %v878 = vadd.f32 %v705, %v874
    %v879 = vld [vmem:[%s16] sm:$0x1]
    %v880 = vld [vmem:[%s17] sm:$0x1]
    %v881 = vsel %vm217, %v877, 0.0
    %882 = vadd.xlane.f32.xlu0 %v881
    %v883 = vpop.xlane.xlu0 %882
    %v884 = vsel %vm217, %v878, 0.0
    %885 = vadd.xlane.f32.xlu0 %v884
    %v886 = vpop.xlane.xlu0 %885
    %v887 = vmul.f32 %v883, %v224
    %v888 = vmul.f32 %v886, %v224
    %v889 = vsub.f32 %v877, %v887
    %v890 = vsub.f32 %v878, %v888
    %v891 = vmul.f32 %v889, %v889
    %v892 = vmul.f32 %v890, %v890
    %v893 = vsel %vm217, %v891, 0.0
    %894 = vadd.xlane.f32.xlu0 %v893
    %v895 = vpop.xlane.xlu0 %894
    %v896 = vsel %vm217, %v892, 0.0
    %897 = vadd.xlane.f32.xlu0 %v896
    %v898 = vpop.xlane.xlu0 %897
    %v899 = vmul.f32 %v895, %v224
    %v900 = vmul.f32 %v898, %v224
    %v901 = vadd.f32 %v899, 1e-12
    %v902 = vadd.f32 %v900, 1e-12
    %v903 = vrsqrt.pop %v901
    %v904 = vrsqrt.pop %v902
    %v905 = vmul.f32 %v889, %v903
    %v906 = vmul.f32 %v890, %v904
    %v908 = vlaneseq
    %v909 = vshrl.u32 %v908, 7
    %v910 = vsub.s32 0, %v909
    %v911 = vrot.slane %v879, %v910
    %v913 = vmul.f32 %v905, %v911
    %v914 = vmul.f32 %v906, %v911
    %v916 = vlaneseq
    %v917 = vshrl.u32 %v916, 7
    %v918 = vsub.s32 0, %v917
    %v919 = vrot.slane %v880, %v918
    %v921 = vadd.f32 %v913, %v919
    %v922 = vadd.f32 %v914, %v919
    %v923 = vpack.c.bf16 %v922, %v921
    %s924 = scalar_lea.vmem %s6, 16
    %v925 = vld [vmem:[%s924] sm:$0xf]
    %v926 = vld [vmem:[%s924 + $0x4] sm:$0xf]
    %v927 = vld [vmem:[%s924 + $0x8] sm:$0xf]
    %v928 = vld [vmem:[%s924 + $0xc] sm:$0xf]
    %s929 = scalar_lea.vmem %s7, 1
    %v930 = vld [vmem:[%s929] sm:$0x1]
    %v932 = vlaneseq
    %v933 = vshrl.u32 %v932, 7
    %v934 = vsub.s32 0, %v933
    %v935 = vrot.slane %v930, %v934
    %v941 = vunpack.c.l.b16 %v925
    %v942 = vunpack.c.l.b16 %v926
    %v943 = vunpack.c.l.b16 %v927
    %v944 = vunpack.c.l.b16 %v928
    %v945 = vpack.c.b16 %v942, %v941
    %v946 = vpack.c.b16 %v944, %v943
    %v950 = vsel %vm217, %v923, 0
    %952 = vmatprep.subr.bf16.mxu0 0
    %953 = vmatpush1.bf16.msra.mxu0 %v945
    %954 = vmatprep.subr.bf16.mxu0 0
    %955 = vmatpush1.bf16.msra.mxu0 %v946
    %956 = vmatprep.subr.bf16.mxu0 0
    %957 = vmatpush1.bf16.msra.mxu0 0
    %958 = vmatprep.subr.bf16.mxu0 0
    %959 = vmatpush1.bf16.msra.mxu0 0
    %960 = vmatprep.subr.bf16.mxu0 0
    %961 = vmatpush1.bf16.msra.mxu0 0
    %962 = vmatprep.subr.bf16.mxu0 0
    %963 = vmatpush1.bf16.msra.mxu0 0
    %964 = vmatprep.subr.bf16.mxu0 0
    %965 = vmatpush1.bf16.msra.mxu0 0
    %966 = vmatprep.subr.bf16.mxu0 0
    %967 = vmatpush1.bf16.msra.mxu0 0
    %968 = vmatprep.subr.bf16.mxu0 0
    %969 = vmatpush1.bf16.msra.mxu0 0
    %970 = vmatprep.subr.bf16.mxu0 0
    %971 = vmatpush1.bf16.msra.mxu0 0
    %972 = vmatprep.subr.bf16.mxu0 0
    %973 = vmatpush1.bf16.msra.mxu0 0
    %974 = vmatprep.subr.bf16.mxu0 0
    %975 = vmatpush1.bf16.msra.mxu0 0
    %976 = vmatprep.subr.bf16.mxu0 0
    %977 = vmatpush1.bf16.msra.mxu0 0
    %978 = vmatprep.subr.bf16.mxu0 0
    %979 = vmatpush1.bf16.msra.mxu0 0
    %980 = vmatprep.subr.bf16.mxu0 0
    %981 = vmatpush1.bf16.msra.mxu0 0
    %982 = vmatprep.subr.bf16.mxu0 0
    %983 = vmatpush1.bf16.msra.mxu0 0
    %984 = vmatprep.mubr.bf16.mxu0 0
    %985 = vmatmul.mubr.bf16.gmra.mrb[0].mxu0 %v950
    %v986 = vpop.f32.mrb[0].mxu0
    %v987 = vadd.f32 %v935, %v986
    %v988 = vpop.f32.mrb[0].mxu0
    %v989 = vpop.f32.mrb[0].mxu0
    %v990 = vadd.f32 %v935, %v989
    %v991 = vpop.f32.mrb[0].mxu0
    %992 = vdwg.mxu0
    %v993 = vpack.c.bf16 %v990, %v987
    %995 = vrot.lane.b32.xlu0 %v993, 96
    %v996 = vpop.permute.xlu0 %995
    %v998 = vsel %vm343, %v993, 0
    %v1001 = vsel %vm343, %v996, 0
    %1003 = vmatprep.subr.bf16.mxu0 0
    %1004 = vmatpush1.bf16.xpose.msra.mxu0 %v1001
    %1005 = vmatprep.subr.bf16.mxu0 0
    %1006 = vmatpush1.bf16.xpose.msra.mxu0 0
    %1007 = vmatprep.subr.bf16.mxu0 0
    %1008 = vmatpush1.bf16.xpose.msra.mxu0 0
    %1009 = vmatprep.subr.bf16.mxu0 0
    %1010 = vmatpush1.bf16.xpose.msra.mxu0 0
    %1011 = vmatprep.subr.bf16.mxu0 0
    %1012 = vmatpush1.bf16.xpose.msra.mxu0 0
    %1013 = vmatprep.subr.bf16.mxu0 0
    %1014 = vmatpush1.bf16.xpose.msra.mxu0 0
    %1015 = vmatprep.subr.bf16.mxu0 0
    %1016 = vmatpush1.bf16.xpose.msra.mxu0 0
    %1017 = vmatprep.subr.bf16.mxu0 0
    %1018 = vmatpush1.bf16.xpose.msra.mxu0 0
    %1019 = vmatprep.subr.bf16.mxu0 0
    %1020 = vmatpush1.bf16.xpose.msra.mxu0 0
    %1021 = vmatprep.subr.bf16.mxu0 0
    %1022 = vmatpush1.bf16.xpose.msra.mxu0 0
    %1023 = vmatprep.subr.bf16.mxu0 0
    %1024 = vmatpush1.bf16.xpose.msra.mxu0 0
    %1025 = vmatprep.subr.bf16.mxu0 0
    %1026 = vmatpush1.bf16.xpose.msra.mxu0 0
    %1027 = vmatprep.subr.bf16.mxu0 0
    %1028 = vmatpush1.bf16.xpose.msra.mxu0 0
    %1029 = vmatprep.subr.bf16.mxu0 0
    %1030 = vmatpush1.bf16.xpose.msra.mxu0 0
    %1031 = vmatprep.subr.bf16.mxu0 0
    %1032 = vmatpush1.bf16.xpose.msra.mxu0 0
    %1033 = vmatprep.subr.bf16.mxu0 0
    %1034 = vmatpush1.bf16.xpose.msra.mxu0 0
    %1035 = vmatprep.mubr.bf16.mxu0 0
    %1036 = vmatmul.mubr.bf16.gmra.mrb[0].mxu0 %v998
    %v1037 = vpop.f32.mrb[0].mxu0
    %v1038 = vadd.f32 %v269, %v1037
    %v1039 = vpop.f32.mrb[0].mxu0
    %v1040 = vpop.f32.mrb[0].mxu0
    %v1041 = vadd.f32 %v270, %v1040
    %v1042 = vpop.f32.mrb[0].mxu0
    %1043 = vdwg.mxu0
    %v1044 = vsel %vm343, %v1038, -inf
    %1045 = vmax.xlane.f32.xlu0 %v1044
    %v1046 = vpop.xlane.xlu0 %1045
    %v1047 = vsel %vm343, %v1041, -inf
    %1048 = vmax.xlane.f32.xlu0 %v1047
    %v1049 = vpop.xlane.xlu0 %1048
    %v1050 = vsub.f32 %v1038, %v1046
    %v1051 = vsub.f32 %v1041, %v1049
    %v1052 = vmul.f32 %v1050, 1.442695
    %v1053 = vpow.pop %v1052
    %v1054 = vmul.f32 %v1051, 1.442695
    %v1055 = vpow.pop %v1054
    %v1056 = vsel %vm343, %v1053, 0.0
    %1057 = vadd.xlane.f32.xlu0 %v1056
    %v1058 = vpop.xlane.xlu0 %1057
    %v1059 = vsel %vm343, %v1055, 0.0
    %1060 = vadd.xlane.f32.xlu0 %v1059
    %v1061 = vpop.xlane.xlu0 %1060
    %v1062 = vrcp.pop %v1058
    %v1063 = vmul.f32 %v1053, %v1062
    %v1064 = vrcp.pop %v1061
    %v1065 = vmul.f32 %v1055, %v1064
    %v1066 = vpack.c.bf16 %v1065, %v1063
    %1067 = vrot.lane.b32.xlu0 %v993, 64
    %v1068 = vpop.permute.xlu0 %1067
    %v1071 = vsel %vm343, %v1066, 0
    %1073 = vmatprep.subr.bf16.mxu0 0
    %1074 = vmatpush1.bf16.msra.mxu0 %v1068
    %1075 = vmatprep.subr.bf16.mxu0 0
    %1076 = vmatpush1.bf16.msra.mxu0 0
    %1077 = vmatprep.subr.bf16.mxu0 0
    %1078 = vmatpush1.bf16.msra.mxu0 0
    %1079 = vmatprep.subr.bf16.mxu0 0
    %1080 = vmatpush1.bf16.msra.mxu0 0
    %1081 = vmatprep.subr.bf16.mxu0 0
    %1082 = vmatpush1.bf16.msra.mxu0 0
    %1083 = vmatprep.subr.bf16.mxu0 0
    %1084 = vmatpush1.bf16.msra.mxu0 0
    %1085 = vmatprep.subr.bf16.mxu0 0
    %1086 = vmatpush1.bf16.msra.mxu0 0
    %1087 = vmatprep.subr.bf16.mxu0 0
    %1088 = vmatpush1.bf16.msra.mxu0 0
    %1089 = vmatprep.subr.bf16.mxu0 0
    %1090 = vmatpush1.bf16.msra.mxu0 0
    %1091 = vmatprep.subr.bf16.mxu0 0
    %1092 = vmatpush1.bf16.msra.mxu0 0
    %1093 = vmatprep.subr.bf16.mxu0 0
    %1094 = vmatpush1.bf16.msra.mxu0 0
    %1095 = vmatprep.subr.bf16.mxu0 0
    %1096 = vmatpush1.bf16.msra.mxu0 0
    %1097 = vmatprep.subr.bf16.mxu0 0
    %1098 = vmatpush1.bf16.msra.mxu0 0
    %1099 = vmatprep.subr.bf16.mxu0 0
    %1100 = vmatpush1.bf16.msra.mxu0 0
    %1101 = vmatprep.subr.bf16.mxu0 0
    %1102 = vmatpush1.bf16.msra.mxu0 0
    %1103 = vmatprep.subr.bf16.mxu0 0
    %1104 = vmatpush1.bf16.msra.mxu0 0
    %1105 = vmatprep.mubr.bf16.mxu0 0
    %1106 = vmatmul.mubr.bf16.gmra.mrb[0].mxu0 %v1071
    %v1107 = vpop.f32.mrb[0].mxu0
    %v1108 = vadd.f32 0.0, %v1107
    %v1109 = vpop.f32.mrb[0].mxu0
    %v1110 = vpop.f32.mrb[0].mxu0
    %v1111 = vadd.f32 0.0, %v1110
    %v1112 = vpop.f32.mrb[0].mxu0
    %1113 = vdwg.mxu0
    %1114 = vrot.lane.b32.xlu0 %v993, 112
    %v1115 = vpop.permute.xlu0 %1114
    %1116 = vrot.lane.b32.xlu0 %v993, 80
    %v1117 = vpop.permute.xlu0 %1116
    %v1119 = vsel %vm343, %v1115, 0
    %v1122 = vsel %vm343, %v1117, 0
    %1124 = vmatprep.subr.bf16.mxu0 0
    %1125 = vmatpush1.bf16.xpose.msra.mxu0 %v1122
    %1126 = vmatprep.subr.bf16.mxu0 0
    %1127 = vmatpush1.bf16.xpose.msra.mxu0 0
    %1128 = vmatprep.subr.bf16.mxu0 0
    %1129 = vmatpush1.bf16.xpose.msra.mxu0 0
    %1130 = vmatprep.subr.bf16.mxu0 0
    %1131 = vmatpush1.bf16.xpose.msra.mxu0 0
    %1132 = vmatprep.subr.bf16.mxu0 0
    %1133 = vmatpush1.bf16.xpose.msra.mxu0 0
    %1134 = vmatprep.subr.bf16.mxu0 0
    %1135 = vmatpush1.bf16.xpose.msra.mxu0 0
    %1136 = vmatprep.subr.bf16.mxu0 0
    %1137 = vmatpush1.bf16.xpose.msra.mxu0 0
    %1138 = vmatprep.subr.bf16.mxu0 0
    %1139 = vmatpush1.bf16.xpose.msra.mxu0 0
    %1140 = vmatprep.subr.bf16.mxu0 0
    %1141 = vmatpush1.bf16.xpose.msra.mxu0 0
    %1142 = vmatprep.subr.bf16.mxu0 0
    %1143 = vmatpush1.bf16.xpose.msra.mxu0 0
    %1144 = vmatprep.subr.bf16.mxu0 0
    %1145 = vmatpush1.bf16.xpose.msra.mxu0 0
    %1146 = vmatprep.subr.bf16.mxu0 0
    %1147 = vmatpush1.bf16.xpose.msra.mxu0 0
    %1148 = vmatprep.subr.bf16.mxu0 0
    %1149 = vmatpush1.bf16.xpose.msra.mxu0 0
    %1150 = vmatprep.subr.bf16.mxu0 0
    %1151 = vmatpush1.bf16.xpose.msra.mxu0 0
    %1152 = vmatprep.subr.bf16.mxu0 0
    %1153 = vmatpush1.bf16.xpose.msra.mxu0 0
    %1154 = vmatprep.subr.bf16.mxu0 0
    %1155 = vmatpush1.bf16.xpose.msra.mxu0 0
    %1156 = vmatprep.mubr.bf16.mxu0 0
    %1157 = vmatmul.mubr.bf16.gmra.mrb[0].mxu0 %v1119
    %v1158 = vpop.f32.mrb[0].mxu0
    %v1159 = vadd.f32 %v269, %v1158
    %v1160 = vpop.f32.mrb[0].mxu0
    %v1161 = vpop.f32.mrb[0].mxu0
    %v1162 = vadd.f32 %v270, %v1161
    %v1163 = vpop.f32.mrb[0].mxu0
    %1164 = vdwg.mxu0
    %v1165 = vsel %vm343, %v1159, -inf
    %1166 = vmax.xlane.f32.xlu0 %v1165
    %v1167 = vpop.xlane.xlu0 %1166
    %v1168 = vsel %vm343, %v1162, -inf
    %1169 = vmax.xlane.f32.xlu0 %v1168
    %v1170 = vpop.xlane.xlu0 %1169
    %v1171 = vsub.f32 %v1159, %v1167
    %v1172 = vsub.f32 %v1162, %v1170
    %v1173 = vmul.f32 %v1171, 1.442695
    %v1174 = vpow.pop %v1173
    %v1175 = vmul.f32 %v1172, 1.442695
    %v1176 = vpow.pop %v1175
    %v1177 = vsel %vm343, %v1174, 0.0
    %1178 = vadd.xlane.f32.xlu0 %v1177
    %v1179 = vpop.xlane.xlu0 %1178
    %v1180 = vsel %vm343, %v1176, 0.0
    %1181 = vadd.xlane.f32.xlu0 %v1180
    %v1182 = vpop.xlane.xlu0 %1181
    %v1183 = vrcp.pop %v1179
    %v1184 = vmul.f32 %v1174, %v1183
    %v1185 = vrcp.pop %v1182
    %v1186 = vmul.f32 %v1176, %v1185
    %v1187 = vpack.c.bf16 %v1186, %v1184
    %1188 = vrot.lane.b32.xlu0 %v993, 48
    %v1189 = vpop.permute.xlu0 %1188
    %v1192 = vsel %vm343, %v1187, 0
    %1194 = vmatprep.subr.bf16.mxu0 0
    %1195 = vmatpush1.bf16.msra.mxu0 %v1189
    %1196 = vmatprep.subr.bf16.mxu0 0
    %1197 = vmatpush1.bf16.msra.mxu0 0
    %1198 = vmatprep.subr.bf16.mxu0 0
    %1199 = vmatpush1.bf16.msra.mxu0 0
    %1200 = vmatprep.subr.bf16.mxu0 0
    %1201 = vmatpush1.bf16.msra.mxu0 0
    %1202 = vmatprep.subr.bf16.mxu0 0
    %1203 = vmatpush1.bf16.msra.mxu0 0
    %1204 = vmatprep.subr.bf16.mxu0 0
    %1205 = vmatpush1.bf16.msra.mxu0 0
    %1206 = vmatprep.subr.bf16.mxu0 0
    %1207 = vmatpush1.bf16.msra.mxu0 0
    %1208 = vmatprep.subr.bf16.mxu0 0
    %1209 = vmatpush1.bf16.msra.mxu0 0
    %1210 = vmatprep.subr.bf16.mxu0 0
    %1211 = vmatpush1.bf16.msra.mxu0 0
    %1212 = vmatprep.subr.bf16.mxu0 0
    %1213 = vmatpush1.bf16.msra.mxu0 0
    %1214 = vmatprep.subr.bf16.mxu0 0
    %1215 = vmatpush1.bf16.msra.mxu0 0
    %1216 = vmatprep.subr.bf16.mxu0 0
    %1217 = vmatpush1.bf16.msra.mxu0 0
    %1218 = vmatprep.subr.bf16.mxu0 0
    %1219 = vmatpush1.bf16.msra.mxu0 0
    %1220 = vmatprep.subr.bf16.mxu0 0
    %1221 = vmatpush1.bf16.msra.mxu0 0
    %1222 = vmatprep.subr.bf16.mxu0 0
    %1223 = vmatpush1.bf16.msra.mxu0 0
    %1224 = vmatprep.subr.bf16.mxu0 0
    %1225 = vmatpush1.bf16.msra.mxu0 0
    %1226 = vmatprep.mubr.bf16.mxu0 0
    %1227 = vmatmul.mubr.bf16.gmra.mrb[0].mxu0 %v1192
    %v1228 = vpop.f32.mrb[0].mxu0
    %v1229 = vadd.f32 0.0, %v1228
    %v1230 = vpop.f32.mrb[0].mxu0
    %v1231 = vpop.f32.mrb[0].mxu0
    %v1232 = vadd.f32 0.0, %v1231
    %v1233 = vpop.f32.mrb[0].mxu0
    %1234 = vdwg.mxu0
    %1237 = vrot.lane.b32.xlu0 %v1229, 16
    %v1238 = vpop.permute.xlu0 %1237
    %1239 = vrot.lane.b32.xlu0 %v1232, 16
    %v1240 = vpop.permute.xlu0 %1239
    %v1243 = vsel %vm343, %v1108, %v1238
    %v1244 = vsel %vm343, %v1111, %v1240
    %v1245 = vpack.c.bf16 %v1244, %v1243
    %s1246 = scalar_lea.vmem %s8, 16
    %v1247 = vld [vmem:[%s1246] sm:$0xf]
    %v1248 = vld [vmem:[%s1246 + $0x4] sm:$0xf]
    %v1249 = vld [vmem:[%s1246 + $0x8] sm:$0xf]
    %v1250 = vld [vmem:[%s1246 + $0xc] sm:$0xf]
    %s1251 = scalar_lea.vmem %s9, 1
    %v1252 = vld [vmem:[%s1251] sm:$0x1]
    %v1254 = vlaneseq
    %v1255 = vshrl.u32 %v1254, 7
    %v1256 = vsub.s32 0, %v1255
    %v1257 = vrot.slane %v1252, %v1256
    %v1263 = vunpack.c.l.b16 %v1247
    %v1264 = vunpack.c.l.b16 %v1248
    %v1265 = vunpack.c.l.b16 %v1249
    %v1266 = vunpack.c.l.b16 %v1250
    %v1267 = vpack.c.b16 %v1264, %v1263
    %v1268 = vpack.c.b16 %v1266, %v1265
    %v1272 = vsel %vm217, %v1245, 0
    %1274 = vmatprep.subr.bf16.mxu0 0
    %1275 = vmatpush1.bf16.msra.mxu0 %v1267
    %1276 = vmatprep.subr.bf16.mxu0 0
    %1277 = vmatpush1.bf16.msra.mxu0 %v1268
    %1278 = vmatprep.subr.bf16.mxu0 0
    %1279 = vmatpush1.bf16.msra.mxu0 0
    %1280 = vmatprep.subr.bf16.mxu0 0
    %1281 = vmatpush1.bf16.msra.mxu0 0
    %1282 = vmatprep.subr.bf16.mxu0 0
    %1283 = vmatpush1.bf16.msra.mxu0 0
    %1284 = vmatprep.subr.bf16.mxu0 0
    %1285 = vmatpush1.bf16.msra.mxu0 0
    %1286 = vmatprep.subr.bf16.mxu0 0
    %1287 = vmatpush1.bf16.msra.mxu0 0
    %1288 = vmatprep.subr.bf16.mxu0 0
    %1289 = vmatpush1.bf16.msra.mxu0 0
    %1290 = vmatprep.subr.bf16.mxu0 0
    %1291 = vmatpush1.bf16.msra.mxu0 0
    %1292 = vmatprep.subr.bf16.mxu0 0
    %1293 = vmatpush1.bf16.msra.mxu0 0
    %1294 = vmatprep.subr.bf16.mxu0 0
    %1295 = vmatpush1.bf16.msra.mxu0 0
    %1296 = vmatprep.subr.bf16.mxu0 0
    %1297 = vmatpush1.bf16.msra.mxu0 0
    %1298 = vmatprep.subr.bf16.mxu0 0
    %1299 = vmatpush1.bf16.msra.mxu0 0
    %1300 = vmatprep.subr.bf16.mxu0 0
    %1301 = vmatpush1.bf16.msra.mxu0 0
    %1302 = vmatprep.subr.bf16.mxu0 0
    %1303 = vmatpush1.bf16.msra.mxu0 0
    %1304 = vmatprep.subr.bf16.mxu0 0
    %1305 = vmatpush1.bf16.msra.mxu0 0
    %1306 = vmatprep.mubr.bf16.mxu0 0
    %1307 = vmatmul.mubr.bf16.gmra.mrb[0].mxu0 %v1272
    %v1308 = vpop.f32.mrb[0].mxu0
    %v1309 = vadd.f32 %v1257, %v1308
    %v1310 = vpop.f32.mrb[0].mxu0
    %v1311 = vpop.f32.mrb[0].mxu0
    %v1312 = vadd.f32 %v1257, %v1311
    %v1313 = vpop.f32.mrb[0].mxu0
    %1314 = vdwg.mxu0
    %v1315 = vadd.f32 %v921, %v1309
    %v1316 = vadd.f32 %v922, %v1312
    %s1317 = scalar_lea.vmem %s10, 1
    %v1318 = vld [vmem:[%s1317] sm:$0x1]
    %s1319 = scalar_lea.vmem %s11, 1
    %v1320 = vld [vmem:[%s1319] sm:$0x1]
    %v1321 = vsel %vm217, %v1315, 0.0
    %1322 = vadd.xlane.f32.xlu0 %v1321
    %v1323 = vpop.xlane.xlu0 %1322
    %v1324 = vsel %vm217, %v1316, 0.0
    %1325 = vadd.xlane.f32.xlu0 %v1324
    %v1326 = vpop.xlane.xlu0 %1325
    %v1327 = vmul.f32 %v1323, %v224
    %v1328 = vmul.f32 %v1326, %v224
    %v1329 = vsub.f32 %v1315, %v1327
    %v1330 = vsub.f32 %v1316, %v1328
    %v1331 = vmul.f32 %v1329, %v1329
    %v1332 = vmul.f32 %v1330, %v1330
    %v1333 = vsel %vm217, %v1331, 0.0
    %1334 = vadd.xlane.f32.xlu0 %v1333
    %v1335 = vpop.xlane.xlu0 %1334
    %v1336 = vsel %vm217, %v1332, 0.0
    %1337 = vadd.xlane.f32.xlu0 %v1336
    %v1338 = vpop.xlane.xlu0 %1337
    %v1339 = vmul.f32 %v1335, %v224
    %v1340 = vmul.f32 %v1338, %v224
    %v1341 = vadd.f32 %v1339, 1e-12
    %v1342 = vadd.f32 %v1340, 1e-12
    %v1343 = vrsqrt.pop %v1341
    %v1344 = vrsqrt.pop %v1342
    %v1345 = vmul.f32 %v1329, %v1343
    %v1346 = vmul.f32 %v1330, %v1344
    %v1348 = vlaneseq
    %v1349 = vshrl.u32 %v1348, 7
    %v1350 = vsub.s32 0, %v1349
    %v1351 = vrot.slane %v1318, %v1350
    %v1353 = vmul.f32 %v1345, %v1351
    %v1354 = vmul.f32 %v1346, %v1351
    %v1356 = vlaneseq
    %v1357 = vshrl.u32 %v1356, 7
    %v1358 = vsub.s32 0, %v1357
    %v1359 = vrot.slane %v1320, %v1358
    %v1361 = vadd.f32 %v1353, %v1359
    %v1362 = vadd.f32 %v1354, %v1359
    %v1363 = vpack.c.bf16 %v1362, %v1361
    %s1364 = scalar_lea.vmem %s12, 16
    %v1365 = vld [vmem:[%s1364] sm:$0xf]
    %v1366 = vld [vmem:[%s1364 + $0x4] sm:$0xf]
    %v1367 = vld [vmem:[%s1364 + $0x8] sm:$0xf]
    %v1368 = vld [vmem:[%s1364 + $0xc] sm:$0xf]
    %s1369 = scalar_lea.vmem %s13, 1
    %v1370 = vld [vmem:[%s1369] sm:$0x1]
    %v1372 = vlaneseq
    %v1373 = vshrl.u32 %v1372, 7
    %v1374 = vsub.s32 0, %v1373
    %v1375 = vrot.slane %v1370, %v1374
    %v1381 = vunpack.c.l.b16 %v1365
    %v1382 = vunpack.c.l.b16 %v1366
    %v1383 = vunpack.c.l.b16 %v1367
    %v1384 = vunpack.c.l.b16 %v1368
    %v1385 = vpack.c.b16 %v1382, %v1381
    %v1386 = vpack.c.b16 %v1384, %v1383
    %v1390 = vsel %vm217, %v1363, 0
    %1392 = vmatprep.subr.bf16.mxu0 0
    %1393 = vmatpush1.bf16.msra.mxu0 %v1385
    %1394 = vmatprep.subr.bf16.mxu0 0
    %1395 = vmatpush1.bf16.msra.mxu0 %v1386
    %1396 = vmatprep.subr.bf16.mxu0 0
    %1397 = vmatpush1.bf16.msra.mxu0 0
    %1398 = vmatprep.subr.bf16.mxu0 0
    %1399 = vmatpush1.bf16.msra.mxu0 0
    %1400 = vmatprep.subr.bf16.mxu0 0
    %1401 = vmatpush1.bf16.msra.mxu0 0
    %1402 = vmatprep.subr.bf16.mxu0 0
    %1403 = vmatpush1.bf16.msra.mxu0 0
    %1404 = vmatprep.subr.bf16.mxu0 0
    %1405 = vmatpush1.bf16.msra.mxu0 0
    %1406 = vmatprep.subr.bf16.mxu0 0
    %1407 = vmatpush1.bf16.msra.mxu0 0
    %1408 = vmatprep.subr.bf16.mxu0 0
    %1409 = vmatpush1.bf16.msra.mxu0 0
    %1410 = vmatprep.subr.bf16.mxu0 0
    %1411 = vmatpush1.bf16.msra.mxu0 0
    %1412 = vmatprep.subr.bf16.mxu0 0
    %1413 = vmatpush1.bf16.msra.mxu0 0
    %1414 = vmatprep.subr.bf16.mxu0 0
    %1415 = vmatpush1.bf16.msra.mxu0 0
    %1416 = vmatprep.subr.bf16.mxu0 0
    %1417 = vmatpush1.bf16.msra.mxu0 0
    %1418 = vmatprep.subr.bf16.mxu0 0
    %1419 = vmatpush1.bf16.msra.mxu0 0
    %1420 = vmatprep.subr.bf16.mxu0 0
    %1421 = vmatpush1.bf16.msra.mxu0 0
    %1422 = vmatprep.subr.bf16.mxu0 0
    %1423 = vmatpush1.bf16.msra.mxu0 0
    %1424 = vmatprep.mubr.bf16.mxu0 0
    %1425 = vmatmul.mubr.bf16.gmra.mrb[0].mxu0 %v1390
    %v1426 = vpop.f32.mrb[0].mxu0
    %v1427 = vadd.f32 %v1375, %v1426
    %v1428 = vpop.f32.mrb[0].mxu0
    %v1429 = vpop.f32.mrb[0].mxu0
    %v1430 = vadd.f32 %v1375, %v1429
    %v1431 = vpop.f32.mrb[0].mxu0
    %1432 = vdwg.mxu0
    %v1433 = vmul.f32 %v1427, 0.5
    %v1434 = vmul.f32 %v1430, 0.5
    %v1435 = vmul.f32 %v1427, 0.044715
    %v1436 = vmul.f32 %v1430, 0.044715
    %v1437 = vmul.f32 %v1435, %v1427
    %v1438 = vmul.f32 %v1436, %v1430
    %v1439 = vmul.f32 %v1437, %v1427
    %v1440 = vmul.f32 %v1438, %v1430
    %v1441 = vadd.f32 %v1427, %v1439
    %v1442 = vadd.f32 %v1430, %v1440
    %v1443 = vmul.f32 %v1441, 0.7978846
    %v1444 = vmul.f32 %v1442, 0.7978846
    %v1445 = vtanh.pop %v1443
    %v1446 = vtanh.pop %v1444
    %v1447 = vadd.f32 %v1445, 1.0
    %v1448 = vadd.f32 %v1446, 1.0
    %v1449 = vmul.f32 %v1433, %v1447
    %v1450 = vmul.f32 %v1434, %v1448
    %v1451 = vpack.c.bf16 %v1450, %v1449
    %s1452 = scalar_lea.vmem %s14, 32
    %v1453 = vld [vmem:[%s1452] sm:$0xf]
    %v1454 = vld [vmem:[%s1452 + $0x4] sm:$0xf]
    %v1455 = vld [vmem:[%s1452 + $0x8] sm:$0xf]
    %v1456 = vld [vmem:[%s1452 + $0xc] sm:$0xf]
    %v1457 = vld [vmem:[%s1452 + $0x10] sm:$0xf]
    %v1458 = vld [vmem:[%s1452 + $0x14] sm:$0xf]
    %v1459 = vld [vmem:[%s1452 + $0x18] sm:$0xf]
    %v1460 = vld [vmem:[%s1452 + $0x1c] sm:$0xf]
    %s1461 = scalar_lea.vmem %s15, 1
    %v1462 = vld [vmem:[%s1461] sm:$0x1]
    %v1464 = vlaneseq
    %v1465 = vshrl.u32 %v1464, 7
    %v1466 = vsub.s32 0, %v1465
    %v1467 = vrot.slane %v1462, %v1466
    %v1477 = vunpack.c.l.b16 %v1453
    %v1478 = vunpack.c.l.b16 %v1454
    %v1479 = vunpack.c.l.b16 %v1455
    %v1480 = vunpack.c.l.b16 %v1456
    %v1481 = vunpack.c.l.b16 %v1457
    %v1482 = vunpack.c.l.b16 %v1458
    %v1483 = vunpack.c.l.b16 %v1459
    %v1484 = vunpack.c.l.b16 %v1460
    %v1485 = vpack.c.b16 %v1478, %v1477
    %v1486 = vpack.c.b16 %v1480, %v1479
    %v1487 = vpack.c.b16 %v1482, %v1481
    %v1488 = vpack.c.b16 %v1484, %v1483
    %v1494 = vsel %vm832, %v1451, 0
    %1496 = vmatprep.subr.bf16.mxu0 0
    %1497 = vmatpush1.bf16.msra.mxu0 %v1485
    %1498 = vmatprep.subr.bf16.mxu0 0
    %1499 = vmatpush1.bf16.msra.mxu0 %v1486
    %1500 = vmatprep.subr.bf16.mxu0 0
    %1501 = vmatpush1.bf16.msra.mxu0 %v1487
    %1502 = vmatprep.subr.bf16.mxu0 0
    %1503 = vmatpush1.bf16.msra.mxu0 %v1488
    %1504 = vmatprep.subr.bf16.mxu0 0
    %1505 = vmatpush1.bf16.msra.mxu0 0
    %1506 = vmatprep.subr.bf16.mxu0 0
    %1507 = vmatpush1.bf16.msra.mxu0 0
    %1508 = vmatprep.subr.bf16.mxu0 0
    %1509 = vmatpush1.bf16.msra.mxu0 0
    %1510 = vmatprep.subr.bf16.mxu0 0
    %1511 = vmatpush1.bf16.msra.mxu0 0
    %1512 = vmatprep.subr.bf16.mxu0 0
    %1513 = vmatpush1.bf16.msra.mxu0 0
    %1514 = vmatprep.subr.bf16.mxu0 0
    %1515 = vmatpush1.bf16.msra.mxu0 0
    %1516 = vmatprep.subr.bf16.mxu0 0
    %1517 = vmatpush1.bf16.msra.mxu0 0
    %1518 = vmatprep.subr.bf16.mxu0 0
    %1519 = vmatpush1.bf16.msra.mxu0 0
    %1520 = vmatprep.subr.bf16.mxu0 0
    %1521 = vmatpush1.bf16.msra.mxu0 0
    %1522 = vmatprep.subr.bf16.mxu0 0
    %1523 = vmatpush1.bf16.msra.mxu0 0
    %1524 = vmatprep.subr.bf16.mxu0 0
    %1525 = vmatpush1.bf16.msra.mxu0 0
    %1526 = vmatprep.subr.bf16.mxu0 0
    %1527 = vmatpush1.bf16.msra.mxu0 0
    %1528 = vmatprep.mubr.bf16.mxu0 0
    %1529 = vmatmul.mubr.bf16.gmra.mrb[0].mxu0 %v1494
    %v1530 = vpop.f32.mrb[0].mxu0
    %v1531 = vadd.f32 %v1467, %v1530
    %v1532 = vpop.f32.mrb[0].mxu0
    %v1533 = vpop.f32.mrb[0].mxu0
    %v1534 = vadd.f32 %v1467, %v1533
    %v1535 = vpop.f32.mrb[0].mxu0
    %1536 = vdwg.mxu0
    %v1537 = vadd.f32 %v1361, %v1531
    %v1538 = vadd.f32 %v1362, %v1534
    %s1539 = scalar_lea.vmem %s16, 1
    %v1540 = vld [vmem:[%s1539] sm:$0x1]
    %s1541 = scalar_lea.vmem %s17, 1
    %v1542 = vld [vmem:[%s1541] sm:$0x1]
    %v1543 = vsel %vm217, %v1537, 0.0
    %1544 = vadd.xlane.f32.xlu0 %v1543
    %v1545 = vpop.xlane.xlu0 %1544
    %v1546 = vsel %vm217, %v1538, 0.0
    %1547 = vadd.xlane.f32.xlu0 %v1546
    %v1548 = vpop.xlane.xlu0 %1547
    %v1549 = vmul.f32 %v1545, %v224
    %v1550 = vmul.f32 %v1548, %v224
    %v1551 = vsub.f32 %v1537, %v1549
    %v1552 = vsub.f32 %v1538, %v1550
    %v1553 = vmul.f32 %v1551, %v1551
    %v1554 = vmul.f32 %v1552, %v1552
    %v1555 = vsel %vm217, %v1553, 0.0
    %1556 = vadd.xlane.f32.xlu0 %v1555
    %v1557 = vpop.xlane.xlu0 %1556
    %v1558 = vsel %vm217, %v1554, 0.0
    %1559 = vadd.xlane.f32.xlu0 %v1558
    %v1560 = vpop.xlane.xlu0 %1559
    %v1561 = vmul.f32 %v1557, %v224
    %v1562 = vmul.f32 %v1560, %v224
    %v1563 = vadd.f32 %v1561, 1e-12
    %v1564 = vadd.f32 %v1562, 1e-12
    %v1565 = vrsqrt.pop %v1563
    %v1566 = vrsqrt.pop %v1564
    %v1567 = vmul.f32 %v1551, %v1565
    %v1568 = vmul.f32 %v1552, %v1566
    %v1570 = vlaneseq
    %v1571 = vshrl.u32 %v1570, 7
    %v1572 = vsub.s32 0, %v1571
    %v1573 = vrot.slane %v1540, %v1572
    %v1575 = vmul.f32 %v1567, %v1573
    %v1576 = vmul.f32 %v1568, %v1573
    %v1578 = vlaneseq
    %v1579 = vshrl.u32 %v1578, 7
    %v1580 = vsub.s32 0, %v1579
    %v1581 = vrot.slane %v1542, %v1580
    %v1583 = vadd.f32 %v1575, %v1581
    %v1584 = vadd.f32 %v1576, %v1581
    %v1586 = vrot.slane %v1584, 7
    %vm1588 = vcmask 1040384
    %v1589 = vsel %vm1588, %v1583, %v1586
    %v1590 = vpack.c.bf16 %v1589, %v1589
    %v1591 = vld [vmem:[%s18] sm:$0xf]
    %v1592 = vld [vmem:[%s18 + $0x4] sm:$0xf]
    %v1593 = vld [vmem:[%s18 + $0x8] sm:$0xf]
    %v1594 = vld [vmem:[%s18 + $0xc] sm:$0xf]
    %v1595 = vld [vmem:[%s19] sm:$0x1]
    %v1597 = vlaneseq
    %v1598 = vshrl.u32 %v1597, 7
    %v1599 = vsub.s32 0, %v1598
    %v1600 = vrot.slane %v1595, %v1599
    %v1606 = vunpack.c.l.b16 %v1591
    %v1607 = vunpack.c.l.b16 %v1592
    %v1608 = vunpack.c.l.b16 %v1593
    %v1609 = vunpack.c.l.b16 %v1594
    %v1610 = vpack.c.b16 %v1607, %v1606
    %v1611 = vpack.c.b16 %v1609, %v1608
    %v1615 = vsel %vm217, %v1590, 0
    %1617 = vmatprep.subr.bf16.mxu0 0
    %1618 = vmatpush1.bf16.msra.mxu0 %v1610
    %1619 = vmatprep.subr.bf16.mxu0 0
    %1620 = vmatpush1.bf16.msra.mxu0 %v1611
    %1621 = vmatprep.subr.bf16.mxu0 0
    %1622 = vmatpush1.bf16.msra.mxu0 0
    %1623 = vmatprep.subr.bf16.mxu0 0
    %1624 = vmatpush1.bf16.msra.mxu0 0
    %1625 = vmatprep.subr.bf16.mxu0 0
    %1626 = vmatpush1.bf16.msra.mxu0 0
    %1627 = vmatprep.subr.bf16.mxu0 0
    %1628 = vmatpush1.bf16.msra.mxu0 0
    %1629 = vmatprep.subr.bf16.mxu0 0
    %1630 = vmatpush1.bf16.msra.mxu0 0
    %1631 = vmatprep.subr.bf16.mxu0 0
    %1632 = vmatpush1.bf16.msra.mxu0 0
    %1633 = vmatprep.subr.bf16.mxu0 0
    %1634 = vmatpush1.bf16.msra.mxu0 0
    %1635 = vmatprep.subr.bf16.mxu0 0
    %1636 = vmatpush1.bf16.msra.mxu0 0
    %1637 = vmatprep.subr.bf16.mxu0 0
    %1638 = vmatpush1.bf16.msra.mxu0 0
    %1639 = vmatprep.subr.bf16.mxu0 0
    %1640 = vmatpush1.bf16.msra.mxu0 0
    %1641 = vmatprep.subr.bf16.mxu0 0
    %1642 = vmatpush1.bf16.msra.mxu0 0
    %1643 = vmatprep.subr.bf16.mxu0 0
    %1644 = vmatpush1.bf16.msra.mxu0 0
    %1645 = vmatprep.subr.bf16.mxu0 0
    %1646 = vmatpush1.bf16.msra.mxu0 0
    %1647 = vmatprep.subr.bf16.mxu0 0
    %1648 = vmatpush1.bf16.msra.mxu0 0
    %1649 = vmatprep.mubr.bf16.mxu0 0
    %1650 = vmatmul.mubr.bf16.gmra.mrb[0].mxu0 %v1615
    %v1651 = vpop.f32.mrb[0].mxu0
    %v1652 = vadd.f32 %v1600, %v1651
    %v1653 = vpop.f32.mrb[0].mxu0
    %v1654 = vpop.f32.mrb[0].mxu0
    %v1655 = vpop.f32.mrb[0].mxu0
    %1656 = vdwg.mxu0
    %v1657 = vtanh.pop %v1652
    %v1658 = vpack.c.bf16 %v1657, %v1657
    %v1659 = vld [vmem:[%s20] sm:$0xf]
    %v1660 = vld [vmem:[%s20 + $0x4] sm:$0xf]
    %v1661 = vld [vmem:[%s20 + $0x8] sm:$0xf]
    %v1662 = vld [vmem:[%s20 + $0xc] sm:$0xf]
    %v1663 = vld [vmem:[%s21] sm:$0x1]
    %v1665 = vlaneseq
    %v1666 = vshrl.u32 %v1665, 7
    %v1667 = vsub.s32 0, %v1666
    %v1668 = vrot.slane %v1663, %v1667
    %v1674 = vunpack.c.l.b16 %v1659
    %v1675 = vunpack.c.l.b16 %v1660
    %v1676 = vunpack.c.l.b16 %v1661
    %v1677 = vunpack.c.l.b16 %v1662
    %v1678 = vpack.c.b16 %v1675, %v1674
    %v1679 = vpack.c.b16 %v1677, %v1676
    %v1683 = vsel %vm217, %v1658, 0
    %1685 = vmatprep.subr.bf16.mxu0 0
    %1686 = vmatpush1.bf16.msra.mxu0 %v1678
    %1687 = vmatprep.subr.bf16.mxu0 0
    %1688 = vmatpush1.bf16.msra.mxu0 %v1679
    %1689 = vmatprep.subr.bf16.mxu0 0
    %1690 = vmatpush1.bf16.msra.mxu0 0
    %1691 = vmatprep.subr.bf16.mxu0 0
    %1692 = vmatpush1.bf16.msra.mxu0 0
    %1693 = vmatprep.subr.bf16.mxu0 0
    %1694 = vmatpush1.bf16.msra.mxu0 0
    %1695 = vmatprep.subr.bf16.mxu0 0
    %1696 = vmatpush1.bf16.msra.mxu0 0
    %1697 = vmatprep.subr.bf16.mxu0 0
    %1698 = vmatpush1.bf16.msra.mxu0 0
    %1699 = vmatprep.subr.bf16.mxu0 0
    %1700 = vmatpush1.bf16.msra.mxu0 0
    %1701 = vmatprep.subr.bf16.mxu0 0
    %1702 = vmatpush1.bf16.msra.mxu0 0
    %1703 = vmatprep.subr.bf16.mxu0 0
    %1704 = vmatpush1.bf16.msra.mxu0 0
    %1705 = vmatprep.subr.bf16.mxu0 0
    %1706 = vmatpush1.bf16.msra.mxu0 0
    %1707 = vmatprep.subr.bf16.mxu0 0
    %1708 = vmatpush1.bf16.msra.mxu0 0
    %1709 = vmatprep.subr.bf16.mxu0 0
    %1710 = vmatpush1.bf16.msra.mxu0 0
    %1711 = vmatprep.subr.bf16.mxu0 0
    %1712 = vmatpush1.bf16.msra.mxu0 0
    %1713 = vmatprep.subr.bf16.mxu0 0
    %1714 = vmatpush1.bf16.msra.mxu0 0
    %1715 = vmatprep.subr.bf16.mxu0 0
    %1716 = vmatpush1.bf16.msra.mxu0 0
    %1717 = vmatprep.mubr.bf16.mxu0 0
    %1718 = vmatmul.mubr.bf16.gmra.mrb[0].mxu0 %v1683
    %v1719 = vpop.f32.mrb[0].mxu0
    %v1720 = vadd.f32 %v1668, %v1719
    %v1721 = vpop.f32.mrb[0].mxu0
    %v1722 = vpop.f32.mrb[0].mxu0
    %v1723 = vpop.f32.mrb[0].mxu0
    %1724 = vdwg.mxu0
    %vm1725 = vcmask 9216
    %1726 = vst.msk [vmem:[#allocation5] sm:$0x3] %vm1725, %v1720
    %v1727 = vsel %vm1725, %v1720, -inf
    %1728 = vmax.xlane.f32.xlu0 %v1727
    %v1729 = vpop.xlane.xlu0 %1728
    %v1730 = vsub.f32 %v1720, %v1729
    %v1731 = vmul.f32 %v1730, 1.442695
    %v1732 = vpow.pop %v1731
    %v1733 = vsel %vm1725, %v1732, 0.0
    %1734 = vadd.xlane.f32.xlu0 %v1733
    %v1735 = vpop.xlane.xlu0 %1734
    %v1736 = vlog2.pop %v1735
    %v1737 = vmul.f32 %v1736, 0.6931472
    %v1738 = vadd.f32 %v1729, %v1737
    %v1739 = vsub.f32 %v1720, %v1738
    %vm1740 = vcmp.eq.s32.totalorder %v262, 0
    %s1741 = sld [smem:[#allocation2]]
    %v1742 = vstv %s1741
    %v1743 = vsel %vm1740, %v1742, 0
    %vm1744 = vcmp.eq.s32.totalorder %v262, 1
    %s1745 = sld [smem:[#allocation2 + $0x1]]
    %v1746 = vstv %s1745
    %v1747 = vsel %vm1744, %v1746, %v1743
    %vm1748 = vcmp.eq.s32.totalorder %v93, %v1747
    %v1749 = vsel %vm1748, 1, 0
    %v1750 = vcvt.s32.f32 %v1749
    %v1751 = vmul.f32 %v1750, %v1739
    %v1752 = vsel %vm1725, %v1751, 0.0
    %1753 = vadd.xlane.f32.xlu0 %v1752
    %v1754 = vpop.xlane.xlu0 %1753
    %v1755 = vsub.f32 0.0, %v1754
    %vm1756 = vcmask 1041408
    %v1757 = vsel %vm1756, %v1755, 0.0
    %v1758 = vrot.slane %v1757, 4
    %v1759 = vadd.f32 %v1757, %v1758
    %v1760 = vrot.slane %v1759, 2
    %v1761 = vadd.f32 %v1759, %v1760
    %v1762 = vrot.slane %v1761, 1
    %v1763 = vadd.f32 %v1761, %v1762
    %v1764 = vmul.f32 %v1763, 0.5
    %vm1765 = vcmask 0
    %1766 = vst.msk [vmem:[#allocation6] sm:$0x1] %vm1765, %v1764
    // Predicated region
    $region98: #{bert_forward.1} parent=1 // pred_check
      _
    $region99: #{bert_forward.1} parent=1 // pred_check_branch
      %1768 = sbr.rel (0) target = $region101
    $region100: #{bert_forward.1} parent=1 // pred_region
      %s1770 = ssub.s32 32, 32
      %1771 = vsyncadd [#allocation3], %s1770
      %s1773 = sshll.u32 [#allocation5], 4
      %s1774 = int_to_ptr.vmem [resolvable:$true] %s1773
      %1776 = dma.vmem_to_hbm [thread:$0]  %s1774, 32, %s23, [#allocation3]
    $region101: #{bert_forward.1} parent=1 // pred_fallthru
      _
    // Predicated region
    $region102: #{bert_forward.1} parent=1 // pred_check
      _
    $region103: #{bert_forward.1} parent=1 // pred_check_branch
      %1778 = sbr.rel (0) target = $region105
    $region104: #{bert_forward.1} parent=1 // pred_region
      %s1780 = ssub.s32 16, 16
      %1781 = vsyncadd [#allocation7], %s1780
      %s1783 = sshll.u32 [#allocation6], 4
      %s1784 = int_to_ptr.vmem [resolvable:$true] %s1783
      %1786 = dma.vmem_to_hbm [thread:$0]  %s1784, 16, %s24, [#allocation7]
    $region105: #{bert_forward.1} parent=1 // pred_fallthru
      _
    // Predicated region
    $region106: #{bert_forward.1} parent=1 // pred_check
      _
    $region107: #{bert_forward.1} parent=1 // pred_check_branch
      %1788 = sbr.rel (0) target = $region109
    $region108: #{bert_forward.1} parent=1 // pred_region
      %1789 = dma.done [#allocation3], 32
    $region109: #{bert_forward.1} parent=1 // pred_fallthru
      _
    // Predicated region
    $region110: #{bert_forward.1} parent=1 // pred_check
      _
    $region111: #{bert_forward.1} parent=1 // pred_check_branch
      %1791 = sbr.rel (0) target = $region113
    $region112: #{bert_forward.1} parent=1 // pred_region
      %1792 = dma.done [#allocation7], 16
    $region113: #{bert_forward.1} parent=1 // pred_fallthru
      _
    %1793 = vsyncpa [#allocation3], 1
    %1794 = vsyncpa [#allocation7], 1
    %1795 = vsyncpa [#allocation4], 1

</llo_original>
